<compile_context>
chip_gen: v7x
topology: tpu7x:2x2x1
jax: 0.10.0
libtpu: 0.0.40
codegen_flags: <defaults>
</compile_context>

<pallas_src>
import functools

import jax
import jax.numpy as jnp
from jax.experimental import pallas as pl
from jax.experimental.pallas import tpu as pltpu


# ----------------------------------------------------------------------------
# Pallas kernel: one grid step processes B batch elements.
#   x_ref      : (B, T, V*Cin)        bf16   input, (t, (v, c))-flattened layout
#   wgd_ref    : (V*Cin, 2*V*Cout)    bf16   [gcn | down] weights, BN scale folded in
#   gdshift_ref: (1, 2*V*Cout)        f32    [gcn | down] bias + BN shift
#   wt_ref     : (KT*V*Cout, V*Cout)  bf16   stacked temporal taps, BN scale folded in
#   tshift_ref : (1, V*Cout)          f32    temporal bias + BN shift
#   o_ref      : (B, T, V*Cout)       f32
#   gp_sc      : (B, T+2*PAD, V*Cout) f32    VMEM scratch with temporal halo rows
# ----------------------------------------------------------------------------
def tcn_gcn_kernel(x_ref, wgd_ref, gdshift_ref, wt_ref, tshift_ref, o_ref, gp_sc):
    B, T, VCi = x_ref.shape
    VCo = o_ref.shape[2]
    PAD = (gp_sc.shape[1] - T) // 2
    KT = wt_ref.shape[0] // VCo

    # Zero only the halo rows.  Done every step (cheap: 2*PAD rows) so it stays
    # correct when the 'parallel' grid axis is split across TensorCores — a
    # pl.when(program_id == 0) guard could skip init on the second core.
    gp_sc[:, :PAD, :] = jnp.zeros((B, PAD, VCo), gp_sc.dtype)
    gp_sc[:, PAD + T:, :] = jnp.zeros((B, PAD, VCo), gp_sc.dtype)

    x = x_ref[...].reshape(B * T, VCi)

    # ---- gcn1 + down1 in a single MXU pass (weights concatenated on the out axis) ----
    gd = jnp.dot(x, wgd_ref[...], preferred_element_type=jnp.float32)   # (B*T, 2*V*Cout)
    gd = jnp.maximum(gd + gdshift_ref[...], 0.0)                        # folded BN + ReLU
    g = gd[:, :VCo]          # gcn branch (post BN+ReLU), feeds the temporal conv
    d = gd[:, VCo:]          # down / residual branch (post BN+ReLU)

    # ---- tcn1: temporal conv, kernel KT, 'same' zero padding, stride 1 ----
    # TODO(synk): temporal stride > 1 (subsampling units) not implemented; stride=1 here.
    gp_sc[:, PAD:PAD + T, :] = g.reshape(B, T, VCo)
    # im2col slab: row (b, t) is the concatenation of the KT temporal taps.  Padding is
    # per batch element (halo rows), so taps never leak across the batch boundary.
    # Each slice is cast to bf16 before the lane-concat so the slab is half-width.
    u = jnp.concatenate(
        [gp_sc[:, j:j + T, :].reshape(B * T, VCo).astype(wt_ref.dtype)
         for j in range(KT)], axis=1)                                    # (B*T, KT*VCo) bf16
    z = jnp.dot(u, wt_ref[...], preferred_element_type=jnp.float32)      # one stacked-K matmul
    z = jnp.maximum(z + tshift_ref[...], 0.0)                            # folded BN + ReLU

    o_ref[...] = (z + d).reshape(B, T, VCo).astype(o_ref.dtype)


# ----------------------------------------------------------------------------
# Host wrapper: weight-only re-packing (glue) + pallas_call
# ----------------------------------------------------------------------------
def _fold_bn(gamma, beta, mean, var, eps=1e-5):
    scale = gamma / jnp.sqrt(var + eps)
    shift = beta - mean * scale
    return scale, shift


@functools.partial(jax.jit, static_argnames=("batch_block",))
def tcn_gcn_unit_forward(x_nchw, params, batch_block=8):
    """x_nchw: (N, Cin, T, V) float32  ->  (N, Cout, T, V) float32."""
    A = params["A"]                       # (K, V, V)
    Wg, bg = params["Wg"], params["bg"]   # (K, Cin, Cout), (K, Cout)
    Wt, bt = params["Wt"], params["bt"]   # (KT, Cout, Cout), (Cout,)
    Wd, bd = params["Wd"], params["bd"]   # (Cin, Cout), (Cout,)

    N, Cin, T, V = x_nchw.shape
    K, _, Cout = Wg.shape
    KT = Wt.shape[0]
    PAD = (KT - 1) // 2
    VCi, VCo = V * Cin, V * Cout

    # The kernel uses a flat (T, V*C) lane layout with per-vertex block-diagonal
    # temporal / down weights.  That is only the lane-dense, VMEM-feasible choice
    # while the whole vertex*channel extent fits one 128-lane tile.
    assert VCo <= 128 and VCi <= 128, (
        "flat (T, V*C) layout is only efficient for V*C <= 128; for wider nets use a "
        "per-vertex (T*V, C) layout with raw (Cout, Cout) / (Cin, Cout) weights")
    # TODO(synk): per-vertex (T*V, Cout) path for Cout >= 128 (realistic ST-GCN widths).

    gs, gb = _fold_bn(*params["gbn"])
    ts, tb = _fold_bn(*params["tbn"])
    ds, db = _fold_bn(*params["dbn"])
    gs_t, ts_t, ds_t = (jnp.tile(v, V) for v in (gs, ts, ds))   # per-(v, o) column scales

    eye = jnp.eye(V, dtype=jnp.float32)
    # combined GCN weight  W[(w,i),(v,o)] = sum_k A[k,w,v] * Wg[k,i,o]   (genuinely dense)
    wg_big = jnp.einsum("kwv,kio->wivo", A, Wg).reshape(VCi, VCo)
    # down-path 1x1 conv -> kron(I_V, Wd)  (block diagonal; small because V*Cout <= 128)
    wd_big = jnp.einsum("wv,io->wivo", eye, Wd).reshape(VCi, VCo)
    # fold BN scale into the output columns and concatenate the two branches
    wgd = jnp.concatenate([wg_big * gs_t[None, :], wd_big * ds_t[None, :]], axis=1)

    # stacked temporal weight: tap j occupies rows [j*VCo, (j+1)*VCo) as kron(I_V, Wt[j])
    wt_stack = jnp.einsum("wv,jio->jwivo", eye, Wt).reshape(KT, VCo, VCo)
    wt_stack = (wt_stack * ts_t[None, None, :]).reshape(KT * VCo, VCo)

    # conv biases folded into the BN shifts (single add per branch inside the kernel);
    # the K partition biases of the gcn 1x1 convs sum up.
    g_shift = jnp.tile(jnp.sum(bg, axis=0) * gs + gb, V)
    d_shift = jnp.tile(bd * ds + db, V)
    t_shift = jnp.tile(bt * ts + tb, V)[None, :]
    gd_shift = jnp.concatenate([g_shift, d_shift])[None, :]

    # bf16 MXU inputs; accumulation and epilogue stay f32 inside the kernel.
    x_flat = jnp.transpose(x_nchw, (0, 2, 3, 1)).reshape(N, T, VCi).astype(jnp.bfloat16)
    wgd = wgd.astype(jnp.bfloat16)
    wt_stack = wt_stack.astype(jnp.bfloat16)

    # B batch elements per grid step -> matmul M dimension is B*T instead of T.
    B = batch_block
    while N % B:
        B -= 1

    grid_spec = pltpu.PrefetchScalarGridSpec(
        num_scalar_prefetch=0,
        grid=(N // B,),
        in_specs=[
            pl.BlockSpec((B, T, VCi), lambda n: (n, 0, 0)),     # x
            pl.BlockSpec((VCi, 2 * VCo), lambda n: (0, 0)),     # [wg | wd]
            pl.BlockSpec((1, 2 * VCo), lambda n: (0, 0)),       # [g_shift | d_shift]
            pl.BlockSpec((KT * VCo, VCo), lambda n: (0, 0)),    # stacked temporal weight
            pl.BlockSpec((1, VCo), lambda n: (0, 0)),           # t_shift
        ],
        out_specs=pl.BlockSpec((B, T, VCo), lambda n: (n, 0, 0)),
        scratch_shapes=[pltpu.VMEM((B, T + 2 * PAD, VCo), jnp.float32)],
    )

    flops = 2 * N * T * VCi * (2 * VCo) + 2 * N * T * (KT * VCo) * VCo
    bytes_accessed = (x_flat.size * 2 + wgd.size * 2 + wt_stack.size * 2
                      + gd_shift.size * 4 + t_shift.size * 4 + N * T * VCo * 4)

    out_flat = pl.pallas_call(
        tcn_gcn_kernel,
        out_shape=jax.ShapeDtypeStruct((N, T, VCo), jnp.float32),
        grid_spec=grid_spec,
        compiler_params=pltpu.CompilerParams(
            dimension_semantics=("parallel",)),
        cost_estimate=pl.CostEstimate(
            flops=flops, transcendentals=0, bytes_accessed=bytes_accessed),
    )(x_flat, wgd, gd_shift, wt_stack, t_shift)

    # back to NCHW
    return jnp.transpose(out_flat.reshape(N, T, V, Cout), (0, 3, 1, 2))


# ----------------------------------------------------------------------------
# Pure-JAX reference (direct transcription of the PyTorch forward, NCHW, f32)
# ----------------------------------------------------------------------------
def reference_forward(x, params):
    A, Wg, bg = params["A"], params["Wg"], params["bg"]
    Wt, bt = params["Wt"], params["bt"]
    Wd, bd = params["Wd"], params["bd"]
    N, Cin, T, V = x.shape
    K = A.shape[0]
    KT = Wt.shape[0]
    PAD = (KT - 1) // 2

    def bn(y, p, eps=1e-5):
        gamma, beta, mean, var = p
        br = lambda v: v[None, :, None, None]
        return (y - br(mean)) / jnp.sqrt(br(var) + eps) * br(gamma) + br(beta)

    # gcn1
    g = jnp.zeros((N, Wg.shape[2], T, V), jnp.float32)
    for k in range(K):
        xa = jnp.einsum("nitw,wv->nitv", x, A[k])
        g = g + jnp.einsum("nitv,io->notv", xa, Wg[k]) + bg[k][None, :, None, None]
    g = jax.nn.relu(bn(g, params["gbn"]))
    # tcn1
    gp = jnp.pad(g, ((0, 0), (0, 0), (PAD, PAD), (0, 0)))
    z = jnp.zeros_like(g)
    for j in range(KT):
        z = z + jnp.einsum("nitv,io->notv", gp[:, :, j:j + T, :], Wt[j])
    z = jax.nn.relu(bn(z + bt[None, :, None, None], params["tbn"]))
    # down1
    d = jnp.einsum("nitv,io->notv", x, Wd) + bd[None, :, None, None]
    d = jax.nn.relu(bn(d, params["dbn"]))
    return z + d


# ----------------------------------------------------------------------------
# Deterministic parameter construction + test
# ----------------------------------------------------------------------------
def make_params(key, K, Cin, Cout, V, KT):
    ks = jax.random.split(key, 16)
    raw = jax.random.uniform(ks[0], (K, V, V), jnp.float32, 0.1, 1.0)
    A = raw / jnp.sum(raw, axis=1, keepdims=True)          # normalized incidence
    Wg = 0.2 * jax.random.normal(ks[1], (K, Cin, Cout), jnp.float32)
    bg = 0.05 * jax.random.normal(ks[2], (K, Cout), jnp.float32)
    Wt = 0.1 * jax.random.normal(ks[3], (KT, Cout, Cout), jnp.float32)
    bt = 0.05 * jax.random.normal(ks[4], (Cout,), jnp.float32)
    Wd = 0.2 * jax.random.normal(ks[5], (Cin, Cout), jnp.float32)
    bd = 0.05 * jax.random.normal(ks[6], (Cout,), jnp.float32)

    def bn_params(k):
        k1, k2, k3, k4 = jax.random.split(k, 4)
        gamma = jax.random.uniform(k1, (Cout,), jnp.float32, 0.8, 1.2)
        beta = 0.1 * jax.random.normal(k2, (Cout,), jnp.float32)
        mean = 0.1 * jax.random.normal(k3, (Cout,), jnp.float32)
        var = jax.random.uniform(k4, (Cout,), jnp.float32, 0.5, 1.5)
        return (gamma, beta, mean, var)

    return dict(A=A, Wg=Wg, bg=bg, Wt=Wt, bt=bt, Wd=Wd, bd=bd,
                gbn=bn_params(ks[7]), tbn=bn_params(ks[8]), dbn=bn_params(ks[9]))


if __name__ == "__main__":
    # Small shapes consistent with the module: Cin=4 -> Cout=8, T=16 frames, V=16 joints,
    # K=3 adjacency partitions, temporal kernel 9, stride 1.  N=16 so the kernel batches
    # 8 examples per grid step (M = B*T = 128 MXU rows) while keeping an even, length-2
    # grid for the two v7x TensorCores.
    N, Cin, Cout, T, V, K, KT = 16, 4, 8, 16, 16, 3, 9

    key = jax.random.PRNGKey(0)
    kx, kp = jax.random.split(key)
    x = jax.random.normal(kx, (N, Cin, T, V), jnp.float32)   # NCHW like PyTorch
    params = make_params(kp, K, Cin, Cout, V, KT)

    out = tcn_gcn_unit_forward(x, params)
    out = jax.block_until_ready(out)

    ref = reference_forward(x, params)
    assert out.shape == (N, Cout, T, V), out.shape
    max_err = float(jnp.max(jnp.abs(out - ref)))
    # bf16 MXU inputs: loosen the pure-f32 2e-3 bound (errors measured well below this).
    assert max_err < 5e-2, f"mismatch vs reference: {max_err}"

    print("KERNEL_OK")
</pallas_src>

<mosaic_0001>
module attributes {stable_mosaic.version = 11 : i64} {
  func.func @tcn_gcn_kernel(%arg0: i32, %arg1: memref<8x16x64xbf16, #tpu.memory_space<vmem>>, %arg2: memref<64x256xbf16, #tpu.memory_space<vmem>>, %arg3: memref<1x256xf32, #tpu.memory_space<vmem>>, %arg4: memref<1152x128xbf16, #tpu.memory_space<vmem>>, %arg5: memref<1x128xf32, #tpu.memory_space<vmem>>, %arg6: memref<8x16x128xf32, #tpu.memory_space<vmem>>, %arg7: memref<8x24x128xf32, #tpu.memory_space<vmem>>) attributes {dimension_semantics = [#tpu.dimension_semantics<parallel>], iteration_bounds = array<i64: 2>, scalar_prefetch = 0 : i64, scratch_operands = 1 : i64, tpu.core_type = #tpu.core_type<tc>, window_params = [{transform_indices = @transform_0, window_bounds = array<i64: 8, 16, 64>}, {pipeline_mode = #tpu.pipeline_mode<synchronous>, transform_indices = @transform_1, window_bounds = array<i64: 64, 256>}, {pipeline_mode = #tpu.pipeline_mode<synchronous>, transform_indices = @transform_2, window_bounds = array<i64: 1, 256>}, {pipeline_mode = #tpu.pipeline_mode<synchronous>, transform_indices = @transform_3, window_bounds = array<i64: 1152, 128>}, {pipeline_mode = #tpu.pipeline_mode<synchronous>, transform_indices = @transform_4, window_bounds = array<i64: 1, 128>}, {transform_indices = @transform_5, window_bounds = array<i64: 8, 16, 128>}]} {
    %cst = arith.constant 0.000000e+00 : f32
    %0 = vector.broadcast %cst : f32 to vector<8x4x128xf32>
    %c0 = arith.constant 0 : index
    %c0_0 = arith.constant 0 : index
    %c0_1 = arith.constant 0 : index
    %1 = vector.load %arg7[%c0, %c0_0, %c0_1] : memref<8x24x128xf32, #tpu.memory_space<vmem>>, vector<8x4x128xf32>
    tpu.vector_store %arg7[%c0, %c0_0, %c0_1], %0 {strides = array<i32>} : memref<8x24x128xf32, #tpu.memory_space<vmem>>, vector<8x4x128xf32>,
    %cst_2 = arith.constant 0.000000e+00 : f32
    %2 = vector.broadcast %cst_2 : f32 to vector<8x4x128xf32>
    %c0_3 = arith.constant 0 : index
    %c20 = arith.constant 20 : index
    %c0_4 = arith.constant 0 : index
    %3 = vector.load %arg7[%c0_3, %c20, %c0_4] : memref<8x24x128xf32, #tpu.memory_space<vmem>>, vector<8x4x128xf32>
    tpu.vector_store %arg7[%c0_3, %c20, %c0_4], %2 {strides = array<i32>} : memref<8x24x128xf32, #tpu.memory_space<vmem>>, vector<8x4x128xf32>,
    %c0_5 = arith.constant 0 : index
    %c0_6 = arith.constant 0 : index
    %c0_7 = arith.constant 0 : index
    %4 = vector.load %arg1[%c0_5, %c0_6, %c0_7] : memref<8x16x64xbf16, #tpu.memory_space<vmem>>, vector<8x16x64xbf16>
    %5 = vector.shape_cast %4 : vector<8x16x64xbf16> to vector<128x64xbf16>
    %c0_8 = arith.constant 0 : index
    %c0_9 = arith.constant 0 : index
    %6 = vector.load %arg2[%c0_8, %c0_9] : memref<64x256xbf16, #tpu.memory_space<vmem>>, vector<64x256xbf16>
    %cst_10 = arith.constant dense<0.000000e+00> : vector<128x256xf32>
    %7 = tpu.matmul %5, %6, %cst_10 {dimension_numbers = #tpu.dot_dimension_numbers<[1], [0], [0], [1], [0, 0, 1, 1], [], []>} : vector<128x64xbf16>, vector<64x256xbf16>, vector<128x256xf32> -> vector<128x256xf32>
    %c0_11 = arith.constant 0 : index
    %c0_12 = arith.constant 0 : index
    %8 = vector.load %arg3[%c0_11, %c0_12] : memref<1x256xf32, #tpu.memory_space<vmem>>, vector<1x256xf32>
    %9 = vector.broadcast %8 : vector<1x256xf32> to vector<128x256xf32>
    %10 = arith.addf %7, %9 : vector<128x256xf32>
    %cst_13 = arith.constant 0.000000e+00 : f32
    %11 = vector.broadcast %cst_13 : f32 to vector<128x256xf32>
    %12 = arith.maximumf %10, %11 : vector<128x256xf32>
    %13 = vector.extract_strided_slice %12 {offsets = [0, 0], sizes = [128, 128], strides = [1, 1]} : vector<128x256xf32> to vector<128x128xf32>
    %14 = vector.extract_strided_slice %12 {offsets = [0, 128], sizes = [128, 128], strides = [1, 1]} : vector<128x256xf32> to vector<128x128xf32>
    %15 = vector.shape_cast %13 : vector<128x128xf32> to vector<8x16x128xf32>
    %c0_14 = arith.constant 0 : index
    %c4 = arith.constant 4 : index
    %c0_15 = arith.constant 0 : index
    %16 = vector.load %arg7[%c0_14, %c4, %c0_15] : memref<8x24x128xf32, #tpu.memory_space<vmem>>, vector<8x16x128xf32>
    tpu.vector_store %arg7[%c0_14, %c4, %c0_15], %15 {strides = array<i32>} : memref<8x24x128xf32, #tpu.memory_space<vmem>>, vector<8x16x128xf32>,
    %c0_16 = arith.constant 0 : index
    %c0_17 = arith.constant 0 : index
    %c0_18 = arith.constant 0 : index
    %17 = vector.load %arg7[%c0_16, %c0_17, %c0_18] : memref<8x24x128xf32, #tpu.memory_space<vmem>>, vector<8x16x128xf32>
    %18 = vector.shape_cast %17 : vector<8x16x128xf32> to vector<128x128xf32>
    %19 = arith.truncf %18 : vector<128x128xf32> to vector<128x128xbf16>
    %c0_19 = arith.constant 0 : index
    %c1 = arith.constant 1 : index
    %c0_20 = arith.constant 0 : index
    %20 = vector.load %arg7[%c0_19, %c1, %c0_20] : memref<8x24x128xf32, #tpu.memory_space<vmem>>, vector<8x16x128xf32>
    %21 = vector.shape_cast %20 : vector<8x16x128xf32> to vector<128x128xf32>
    %22 = arith.truncf %21 : vector<128x128xf32> to vector<128x128xbf16>
    %c0_21 = arith.constant 0 : index
    %c2 = arith.constant 2 : index
    %c0_22 = arith.constant 0 : index
    %23 = vector.load %arg7[%c0_21, %c2, %c0_22] : memref<8x24x128xf32, #tpu.memory_space<vmem>>, vector<8x16x128xf32>
    %24 = vector.shape_cast %23 : vector<8x16x128xf32> to vector<128x128xf32>
    %25 = arith.truncf %24 : vector<128x128xf32> to vector<128x128xbf16>
    %c0_23 = arith.constant 0 : index
    %c3 = arith.constant 3 : index
    %c0_24 = arith.constant 0 : index
    %26 = vector.load %arg7[%c0_23, %c3, %c0_24] : memref<8x24x128xf32, #tpu.memory_space<vmem>>, vector<8x16x128xf32>
    %27 = vector.shape_cast %26 : vector<8x16x128xf32> to vector<128x128xf32>
    %28 = arith.truncf %27 : vector<128x128xf32> to vector<128x128xbf16>
    %c0_25 = arith.constant 0 : index
    %c4_26 = arith.constant 4 : index
    %c0_27 = arith.constant 0 : index
    %29 = vector.load %arg7[%c0_25, %c4_26, %c0_27] : memref<8x24x128xf32, #tpu.memory_space<vmem>>, vector<8x16x128xf32>
    %30 = vector.shape_cast %29 : vector<8x16x128xf32> to vector<128x128xf32>
    %31 = arith.truncf %30 : vector<128x128xf32> to vector<128x128xbf16>
    %c0_28 = arith.constant 0 : index
    %c5 = arith.constant 5 : index
    %c0_29 = arith.constant 0 : index
    %32 = vector.load %arg7[%c0_28, %c5, %c0_29] : memref<8x24x128xf32, #tpu.memory_space<vmem>>, vector<8x16x128xf32>
    %33 = vector.shape_cast %32 : vector<8x16x128xf32> to vector<128x128xf32>
    %34 = arith.truncf %33 : vector<128x128xf32> to vector<128x128xbf16>
    %c0_30 = arith.constant 0 : index
    %c6 = arith.constant 6 : index
    %c0_31 = arith.constant 0 : index
    %35 = vector.load %arg7[%c0_30, %c6, %c0_31] : memref<8x24x128xf32, #tpu.memory_space<vmem>>, vector<8x16x128xf32>
    %36 = vector.shape_cast %35 : vector<8x16x128xf32> to vector<128x128xf32>
    %37 = arith.truncf %36 : vector<128x128xf32> to vector<128x128xbf16>
    %c0_32 = arith.constant 0 : index
    %c7 = arith.constant 7 : index
    %c0_33 = arith.constant 0 : index
    %38 = vector.load %arg7[%c0_32, %c7, %c0_33] : memref<8x24x128xf32, #tpu.memory_space<vmem>>, vector<8x16x128xf32>
    %39 = vector.shape_cast %38 : vector<8x16x128xf32> to vector<128x128xf32>
    %40 = arith.truncf %39 : vector<128x128xf32> to vector<128x128xbf16>
    %c0_34 = arith.constant 0 : index
    %c8 = arith.constant 8 : index
    %c0_35 = arith.constant 0 : index
    %41 = vector.load %arg7[%c0_34, %c8, %c0_35] : memref<8x24x128xf32, #tpu.memory_space<vmem>>, vector<8x16x128xf32>
    %42 = vector.shape_cast %41 : vector<8x16x128xf32> to vector<128x128xf32>
    %43 = arith.truncf %42 : vector<128x128xf32> to vector<128x128xbf16>
    %44 = tpu.concatenate %19, %22, %25, %28, %31, %34, %37, %40, %43 in 1 : vector<128x128xbf16>, vector<128x128xbf16>, vector<128x128xbf16>, vector<128x128xbf16>, vector<128x128xbf16>, vector<128x128xbf16>, vector<128x128xbf16>, vector<128x128xbf16>, vector<128x128xbf16> -> vector<128x1152xbf16>
    %c0_36 = arith.constant 0 : index
    %c0_37 = arith.constant 0 : index
    %45 = vector.load %arg4[%c0_36, %c0_37] : memref<1152x128xbf16, #tpu.memory_space<vmem>>, vector<1152x128xbf16>
    %cst_38 = arith.constant dense<0.000000e+00> : vector<128x128xf32>
    %46 = tpu.matmul %44, %45, %cst_38 {dimension_numbers = #tpu.dot_dimension_numbers<[1], [0], [0], [1], [0, 0, 1, 1], [], []>} : vector<128x1152xbf16>, vector<1152x128xbf16>, vector<128x128xf32> -> vector<128x128xf32>
    %c0_39 = arith.constant 0 : index
    %c0_40 = arith.constant 0 : index
    %47 = vector.load %arg5[%c0_39, %c0_40] : memref<1x128xf32, #tpu.memory_space<vmem>>, vector<1x128xf32>
    %48 = vector.broadcast %47 : vector<1x128xf32> to vector<128x128xf32>
    %49 = arith.addf %46, %48 : vector<128x128xf32>
    %cst_41 = arith.constant 0.000000e+00 : f32
    %50 = vector.broadcast %cst_41 : f32 to vector<128x128xf32>
    %51 = arith.maximumf %49, %50 : vector<128x128xf32>
    %52 = arith.addf %51, %14 : vector<128x128xf32>
    %53 = vector.shape_cast %52 : vector<128x128xf32> to vector<8x16x128xf32>
    %c0_42 = arith.constant 0 : index
    %c0_43 = arith.constant 0 : index
    %c0_44 = arith.constant 0 : index
    %54 = vector.load %arg6[%c0_42, %c0_43, %c0_44] : memref<8x16x128xf32, #tpu.memory_space<vmem>>, vector<8x16x128xf32>
    tpu.vector_store %arg6[%c0_42, %c0_43, %c0_44], %53 {strides = array<i32>} : memref<8x16x128xf32, #tpu.memory_space<vmem>>, vector<8x16x128xf32>,
    return
  }
  func.func @transform_0(%arg0: i32) -> (i32, i32, i32) {
    %c0_i32 = arith.constant 0 : i32
    %c0_i32_0 = arith.constant 0 : i32
    %c0_i32_1 = arith.constant 0 : i32
    return %arg0, %c0_i32, %c0_i32_0 : i32, i32, i32
  }
  func.func @transform_1(%arg0: i32) -> (i32, i32) {
    %c0_i32 = arith.constant 0 : i32
    %c0_i32_0 = arith.constant 0 : i32
    %c0_i32_1 = arith.constant 0 : i32
    return %c0_i32, %c0_i32_0 : i32, i32
  }
  func.func @transform_2(%arg0: i32) -> (i32, i32) {
    %c0_i32 = arith.constant 0 : i32
    %c0_i32_0 = arith.constant 0 : i32
    %c0_i32_1 = arith.constant 0 : i32
    return %c0_i32, %c0_i32_0 : i32, i32
  }
  func.func @transform_3(%arg0: i32) -> (i32, i32) {
    %c0_i32 = arith.constant 0 : i32
    %c0_i32_0 = arith.constant 0 : i32
    %c0_i32_1 = arith.constant 0 : i32
    return %c0_i32, %c0_i32_0 : i32, i32
  }
  func.func @transform_4(%arg0: i32) -> (i32, i32) {
    %c0_i32 = arith.constant 0 : i32
    %c0_i32_0 = arith.constant 0 : i32
    %c0_i32_1 = arith.constant 0 : i32
    return %c0_i32, %c0_i32_0 : i32, i32
  }
  func.func @transform_5(%arg0: i32) -> (i32, i32, i32) {
    %c0_i32 = arith.constant 0 : i32
    %c0_i32_0 = arith.constant 0 : i32
    %c0_i32_1 = arith.constant 0 : i32
    return %arg0, %c0_i32, %c0_i32_0 : i32, i32, i32
  }
}

</mosaic_0001>

<llo_original>
// kernel: tile.33
$region0: #{tile.33}
  #allocation0 [shape = 's32[1]{0}', space=sflag, size = 0x4, scoped, tag = 'scoped memory for tile.33']
  %s0 = inlined_call_operand.vmem [shape: f32[8], index: 0, kind: input, shape index: {}]
  %s1 = inlined_call_operand.vmem [shape: f32[16,8], index: 1, kind: output, shape index: {}]
  // Predicated region
  $region2: #{tile.33} parent=0 // pred_check
    _
  $region3: #{tile.33} parent=0 // pred_check_branch
    %3 = sbr.rel (0) target = $region5
  $region4: #{tile.33} parent=0 // pred_region
    _
  $region5: #{tile.33} parent=0 // pred_fallthru
    _
  %v4 = vld [vmem:[%s0] ss:$0 sm:$0xff]
  %5 = vst [vmem:[%s1] sm:$0xff] %v4
  %s6 = scalar_lea.vmem %s1, 8
  %7 = vst [vmem:[%s6] sm:$0xff] %v4

// kernel: mul.22
$region0: #{mul.22}
  %s0 = inlined_call_operand.vmem [shape: f32[16,8], index: 0, kind: input, shape index: {}]
  %s1 = inlined_call_operand.vmem [shape: f32[128], index: 1, kind: output, shape index: {}]
  $region1: #{mul.22} parent=0
    #allocation0 [shape = 'u8[4096]{0}', space=vmem, size = 0x1000, scoped, tag = 'scoped mem for output reshape']
    %v2 = vld [vmem:[%s0] sm:$0x1]
    %vm3 = vcmask 64512
    %4 = vst.msk [vmem:[#allocation0] sm:$0x1] %vm3, %v2
    %s5 = scalar_lea.vmem %s0, 15
    %v6 = vld [vmem:[%s5] sm:$0x1]
    %7 = vrot.lane.b32.xlu0 %v6, 120
    %v8 = vpop.permute.xlu0 %7
    %vm9 = vcmask 1048512
    %10 = vst.msk [vmem:[#allocation0] sm:$0x1] %vm9, %v8
    %s11 = scalar_lea.vmem %s0, 14
    %v12 = vld [vmem:[%s11] sm:$0x1]
    %13 = vrot.lane.b32.xlu0 %v12, 112
    %v14 = vpop.permute.xlu0 %13
    %vm15 = vcmask 982912
    %16 = vst.msk [vmem:[#allocation0] sm:$0x1] %vm15, %v14
    %s17 = scalar_lea.vmem %s0, 13
    %v18 = vld [vmem:[%s17] sm:$0x1]
    %19 = vrot.lane.b32.xlu0 %v18, 104
    %v20 = vpop.permute.xlu0 %19
    %vm21 = vcmask 917312
    %22 = vst.msk [vmem:[#allocation0] sm:$0x1] %vm21, %v20
    %s23 = scalar_lea.vmem %s0, 12
    %v24 = vld [vmem:[%s23] sm:$0x1]
    %25 = vrot.lane.b32.xlu0 %v24, 96
    %v26 = vpop.permute.xlu0 %25
    %vm27 = vcmask 851712
    %28 = vst.msk [vmem:[#allocation0] sm:$0x1] %vm27, %v26
    %s29 = scalar_lea.vmem %s0, 11
    %v30 = vld [vmem:[%s29] sm:$0x1]
    %31 = vrot.lane.b32.xlu0 %v30, 88
    %v32 = vpop.permute.xlu0 %31
    %vm33 = vcmask 786112
    %34 = vst.msk [vmem:[#allocation0] sm:$0x1] %vm33, %v32
    %s35 = scalar_lea.vmem %s0, 10
    %v36 = vld [vmem:[%s35] sm:$0x1]
    %37 = vrot.lane.b32.xlu0 %v36, 80
    %v38 = vpop.permute.xlu0 %37
    %vm39 = vcmask 720512
    %40 = vst.msk [vmem:[#allocation0] sm:$0x1] %vm39, %v38
    %s41 = scalar_lea.vmem %s0, 9
    %v42 = vld [vmem:[%s41] sm:$0x1]
    %43 = vrot.lane.b32.xlu0 %v42, 72
    %v44 = vpop.permute.xlu0 %43
    %vm45 = vcmask 654912
    %46 = vst.msk [vmem:[#allocation0] sm:$0x1] %vm45, %v44
    %s47 = scalar_lea.vmem %s0, 8
    %v48 = vld [vmem:[%s47] sm:$0x1]
    %49 = vrot.lane.b32.xlu0 %v48, 64
    %v50 = vpop.permute.xlu0 %49
    %vm51 = vcmask 589312
    %52 = vst.msk [vmem:[#allocation0] sm:$0x1] %vm51, %v50
    %s53 = scalar_lea.vmem %s0, 7
    %v54 = vld [vmem:[%s53] sm:$0x1]
    %55 = vrot.lane.b32.xlu0 %v54, 56
    %v56 = vpop.permute.xlu0 %55
    %vm57 = vcmask 523712
    %58 = vst.msk [vmem:[#allocation0] sm:$0x1] %vm57, %v56
    %s59 = scalar_lea.vmem %s0, 6
    %v60 = vld [vmem:[%s59] sm:$0x1]
    %61 = vrot.lane.b32.xlu0 %v60, 48
    %v62 = vpop.permute.xlu0 %61
    %vm63 = vcmask 458112
    %64 = vst.msk [vmem:[#allocation0] sm:$0x1] %vm63, %v62
    %s65 = scalar_lea.vmem %s0, 5
    %v66 = vld [vmem:[%s65] sm:$0x1]
    %67 = vrot.lane.b32.xlu0 %v66, 40
    %v68 = vpop.permute.xlu0 %67
    %vm69 = vcmask 392512
    %70 = vst.msk [vmem:[#allocation0] sm:$0x1] %vm69, %v68
    %s71 = scalar_lea.vmem %s0, 4
    %v72 = vld [vmem:[%s71] sm:$0x1]
    %73 = vrot.lane.b32.xlu0 %v72, 32
    %v74 = vpop.permute.xlu0 %73
    %vm75 = vcmask 326912
    %76 = vst.msk [vmem:[#allocation0] sm:$0x1] %vm75, %v74
    %s77 = scalar_lea.vmem %s0, 3
    %v78 = vld [vmem:[%s77] sm:$0x1]
    %79 = vrot.lane.b32.xlu0 %v78, 24
    %v80 = vpop.permute.xlu0 %79
    %vm81 = vcmask 261312
    %82 = vst.msk [vmem:[#allocation0] sm:$0x1] %vm81, %v80
    %s83 = scalar_lea.vmem %s0, 2
    %v84 = vld [vmem:[%s83] sm:$0x1]
    %85 = vrot.lane.b32.xlu0 %v84, 16
    %v86 = vpop.permute.xlu0 %85
    %vm87 = vcmask 195712
    %88 = vst.msk [vmem:[#allocation0] sm:$0x1] %vm87, %v86
    %s89 = scalar_lea.vmem %s0, 1
    %v90 = vld [vmem:[%s89] sm:$0x1]
    %91 = vrot.lane.b32.xlu0 %v90, 8
    %v92 = vpop.permute.xlu0 %91
    %vm93 = vcmask 130112
    %94 = vst.msk [vmem:[#allocation0] sm:$0x1] %vm93, %v92
    %s96 = sshllo.u32 0, 1
    %v98 = vld [vmem:[#allocation0] sm:%s96]
    %s99 = sshllo.u32 0, 1
    %100 = vst [vmem:[%s1] sm:%s99] %v98

// kernel: tile.59
$region0: #{tile.59}
  %s0 = inlined_call_operand.vmem [shape: f32[16,8], index: 0, kind: input, shape index: {}]
  %s1 = inlined_call_operand.vmem [shape: f32[1,128], index: 1, kind: output, shape index: {}]
  $region1: #{tile.59} parent=0
    #allocation0 [shape = 'u8[4096]{0}', space=vmem, size = 0x1000, scoped, tag = 'scoped mem for output reshape']
    %v2 = vld [vmem:[%s0] sm:$0x1]
    %vm3 = vcmask 64512
    %4 = vst.msk [vmem:[#allocation0] sm:$0x1] %vm3, %v2
    %s5 = scalar_lea.vmem %s0, 15
    %v6 = vld [vmem:[%s5] sm:$0x1]
    %7 = vrot.lane.b32.xlu0 %v6, 120
    %v8 = vpop.permute.xlu0 %7
    %vm9 = vcmask 1048512
    %10 = vst.msk [vmem:[#allocation0] sm:$0x1] %vm9, %v8
    %s11 = scalar_lea.vmem %s0, 14
    %v12 = vld [vmem:[%s11] sm:$0x1]
    %13 = vrot.lane.b32.xlu0 %v12, 112
    %v14 = vpop.permute.xlu0 %13
    %vm15 = vcmask 982912
    %16 = vst.msk [vmem:[#allocation0] sm:$0x1] %vm15, %v14
    %s17 = scalar_lea.vmem %s0, 13
    %v18 = vld [vmem:[%s17] sm:$0x1]
    %19 = vrot.lane.b32.xlu0 %v18, 104
    %v20 = vpop.permute.xlu0 %19
    %vm21 = vcmask 917312
    %22 = vst.msk [vmem:[#allocation0] sm:$0x1] %vm21, %v20
    %s23 = scalar_lea.vmem %s0, 12
    %v24 = vld [vmem:[%s23] sm:$0x1]
    %25 = vrot.lane.b32.xlu0 %v24, 96
    %v26 = vpop.permute.xlu0 %25
    %vm27 = vcmask 851712
    %28 = vst.msk [vmem:[#allocation0] sm:$0x1] %vm27, %v26
    %s29 = scalar_lea.vmem %s0, 11
    %v30 = vld [vmem:[%s29] sm:$0x1]
    %31 = vrot.lane.b32.xlu0 %v30, 88
    %v32 = vpop.permute.xlu0 %31
    %vm33 = vcmask 786112
    %34 = vst.msk [vmem:[#allocation0] sm:$0x1] %vm33, %v32
    %s35 = scalar_lea.vmem %s0, 10
    %v36 = vld [vmem:[%s35] sm:$0x1]
    %37 = vrot.lane.b32.xlu0 %v36, 80
    %v38 = vpop.permute.xlu0 %37
    %vm39 = vcmask 720512
    %40 = vst.msk [vmem:[#allocation0] sm:$0x1] %vm39, %v38
    %s41 = scalar_lea.vmem %s0, 9
    %v42 = vld [vmem:[%s41] sm:$0x1]
    %43 = vrot.lane.b32.xlu0 %v42, 72
    %v44 = vpop.permute.xlu0 %43
    %vm45 = vcmask 654912
    %46 = vst.msk [vmem:[#allocation0] sm:$0x1] %vm45, %v44
    %s47 = scalar_lea.vmem %s0, 8
    %v48 = vld [vmem:[%s47] sm:$0x1]
    %49 = vrot.lane.b32.xlu0 %v48, 64
    %v50 = vpop.permute.xlu0 %49
    %vm51 = vcmask 589312
    %52 = vst.msk [vmem:[#allocation0] sm:$0x1] %vm51, %v50
    %s53 = scalar_lea.vmem %s0, 7
    %v54 = vld [vmem:[%s53] sm:$0x1]
    %55 = vrot.lane.b32.xlu0 %v54, 56
    %v56 = vpop.permute.xlu0 %55
    %vm57 = vcmask 523712
    %58 = vst.msk [vmem:[#allocation0] sm:$0x1] %vm57, %v56
    %s59 = scalar_lea.vmem %s0, 6
    %v60 = vld [vmem:[%s59] sm:$0x1]
    %61 = vrot.lane.b32.xlu0 %v60, 48
    %v62 = vpop.permute.xlu0 %61
    %vm63 = vcmask 458112
    %64 = vst.msk [vmem:[#allocation0] sm:$0x1] %vm63, %v62
    %s65 = scalar_lea.vmem %s0, 5
    %v66 = vld [vmem:[%s65] sm:$0x1]
    %67 = vrot.lane.b32.xlu0 %v66, 40
    %v68 = vpop.permute.xlu0 %67
    %vm69 = vcmask 392512
    %70 = vst.msk [vmem:[#allocation0] sm:$0x1] %vm69, %v68
    %s71 = scalar_lea.vmem %s0, 4
    %v72 = vld [vmem:[%s71] sm:$0x1]
    %73 = vrot.lane.b32.xlu0 %v72, 32
    %v74 = vpop.permute.xlu0 %73
    %vm75 = vcmask 326912
    %76 = vst.msk [vmem:[#allocation0] sm:$0x1] %vm75, %v74
    %s77 = scalar_lea.vmem %s0, 3
    %v78 = vld [vmem:[%s77] sm:$0x1]
    %79 = vrot.lane.b32.xlu0 %v78, 24
    %v80 = vpop.permute.xlu0 %79
    %vm81 = vcmask 261312
    %82 = vst.msk [vmem:[#allocation0] sm:$0x1] %vm81, %v80
    %s83 = scalar_lea.vmem %s0, 2
    %v84 = vld [vmem:[%s83] sm:$0x1]
    %85 = vrot.lane.b32.xlu0 %v84, 16
    %v86 = vpop.permute.xlu0 %85
    %vm87 = vcmask 195712
    %88 = vst.msk [vmem:[#allocation0] sm:$0x1] %vm87, %v86
    %s89 = scalar_lea.vmem %s0, 1
    %v90 = vld [vmem:[%s89] sm:$0x1]
    %91 = vrot.lane.b32.xlu0 %v90, 8
    %v92 = vpop.permute.xlu0 %91
    %vm93 = vcmask 130112
    %94 = vst.msk [vmem:[#allocation0] sm:$0x1] %vm93, %v92
    %s96 = sshllo.u32 0, 1
    %v98 = vld [vmem:[#allocation0] sm:%s96]
    %s99 = sshllo.u32 0, 1
    %100 = vst [vmem:[%s1] sm:%s99] %v98

// kernel: tcn_gcn_unit_forward.1
$region0: #{tcn_gcn_unit_forward.1}
  #allocation0 [shape = 'u32[]', space=smem, size = 0x4, offset = 0x4, fixed_abs, tag = 'smem constant byte address 0x4 - core index']
  #allocation1 [shape = 'u32[144,128]{1,0:T(1,128)}', space=vmem, size = 0x12000, scoped, tag = 'internal scratch']
  #allocation2 [shape = 'f32[8,24,128]{2,1,0:T(8,128)}', space=vmem, size = 0x18000, scoped, tag = 'scratch operand']
  %s0 = inlined_call_operand.vmem [shape: bf16[16,16,64], index: 0, kind: input, shape index: {}]
  %s1 = inlined_call_operand.vmem [shape: bf16[64,256], index: 1, kind: input, shape index: {}]
  %s2 = inlined_call_operand.vmem [shape: f32[1,256], index: 2, kind: input, shape index: {}]
  %s3 = inlined_call_operand.vmem [shape: bf16[1152,128], index: 3, kind: input, shape index: {}]
  %s4 = inlined_call_operand.vmem [shape: f32[1,128], index: 4, kind: input, shape index: {}]
  %s5 = inlined_call_operand.vmem [shape: f32[16,16,128], index: 5, kind: output, shape index: {}]
  %s6 = sld [smem:[#allocation0]]
  $region53: #{tcn_gcn_unit_forward.1} parent=0
    _
  %s8 = ssub.s32 1, %s6
  %s9 = scalar_select 0, %s8, %s6
  loop: start=0, step=1, limit=4
  $region2: #{tcn_gcn_unit_forward.1} parent=0 // loop_pre_header
    _
  $region3: #{tcn_gcn_unit_forward.1} parent=0 // loop_header
    %s11 = sphi 0, %s15
    %p12 = scmp.ge.s32.totalorder %s11, 4
    %s21 = sphi 0, %s23
    %s24 = sphi 0, %s21
    %s25 = sphi 0, %s24
    %s41 = sphi 0, %s25
    %s45 = sphi 0, %s45
    %s47 = sphi 0, %s45
    %s48 = sphi 0, %s47
    %s62 = sphi 0, %s48
    %s66 = sphi 0, %s66
    %s68 = sphi 0, %s66
    %s69 = sphi 0, %s68
    %s83 = sphi 0, %s69
    %s87 = sphi 0, %s87
    %s89 = sphi 0, %s87
    %s90 = sphi 0, %s89
    %s104 = sphi 0, %s90
    %s108 = sphi 0, %s108
    %s110 = sphi 0, %s108
    %s111 = sphi 0, %s110
    %s125 = sphi 0, %s111
    %s131 = sphi 0, %s133
    %s134 = sphi 0, %s131
    %s135 = sphi 0, %s134
    %s151 = sphi 0, %s135
  $region4: #{tcn_gcn_unit_forward.1} parent=0 // loop_header_branch
    %14 = sbr.rel (%p12) target = $region8
  $region5: #{tcn_gcn_unit_forward.1} parent=0 // loop_body
    %s16 = ssub.s32 %s11, 1
    %s17 = ssub.s32 %s11, 2
    %s18 = sadd.s32 %s11, 1
    %s19 = ssub.s32 %s11, %s18
    %p20 = scmp.eq.s32.totalorder %s19, 0
    %s22 = sadd.s32 %s21, 1
    %s23 = scalar_select %p20, %s21, %s22
    %p26 = pneg %p20
    %p27 = scmp.eq.s32.totalorder %s11, 1
    %p28 = por %p26, %p27
    %p29 = scmp.ne.s32.totalorder %s21, %s24
    %p30 = scmp.eq.s32.totalorder %s11, 0
    %p31 = por %p29, %p30
    %p32 = scmp.ne.s32.totalorder %s21, %s24
    %p33 = scmp.eq.s32.totalorder %s16, 1
    %p34 = por %p32, %p33
    %p35 = scmp.ne.s32.totalorder %s24, %s25
    %p36 = scmp.eq.s32.totalorder %s16, 0
    %p37 = por %p35, %p36
    %p38 = scmp.ne.s32.totalorder %s24, %s25
    %p39 = scmp.eq.s32.totalorder %s17, 1
    %p40 = por %p38, %p39
    %p42 = scmp.ne.s32.totalorder %s25, %s41
    %p43 = scmp.eq.s32.totalorder %s17, 0
    %p44 = por %p42, %p43
    %s46 = sadd.s32 %s45, 1
    %p49 = scmp.eq.s32.totalorder %s11, 1
    %p50 = scmp.ne.s32.totalorder %s45, %s47
    %p51 = scmp.eq.s32.totalorder %s11, 0
    %p52 = por %p50, %p51
    %p53 = scmp.ne.s32.totalorder %s45, %s47
    %p54 = scmp.eq.s32.totalorder %s16, 1
    %p55 = por %p53, %p54
    %p56 = scmp.ne.s32.totalorder %s47, %s48
    %p57 = scmp.eq.s32.totalorder %s16, 0
    %p58 = por %p56, %p57
    %p59 = scmp.ne.s32.totalorder %s47, %s48
    %p60 = scmp.eq.s32.totalorder %s17, 1
    %p61 = por %p59, %p60
    %p63 = scmp.ne.s32.totalorder %s48, %s62
    %p64 = scmp.eq.s32.totalorder %s17, 0
    %p65 = por %p63, %p64
    %s67 = sadd.s32 %s66, 1
    %p70 = scmp.eq.s32.totalorder %s11, 1
    %p71 = scmp.ne.s32.totalorder %s66, %s68
    %p72 = scmp.eq.s32.totalorder %s11, 0
    %p73 = por %p71, %p72
    %p74 = scmp.ne.s32.totalorder %s66, %s68
    %p75 = scmp.eq.s32.totalorder %s16, 1
    %p76 = por %p74, %p75
    %p77 = scmp.ne.s32.totalorder %s68, %s69
    %p78 = scmp.eq.s32.totalorder %s16, 0
    %p79 = por %p77, %p78
    %p80 = scmp.ne.s32.totalorder %s68, %s69
    %p81 = scmp.eq.s32.totalorder %s17, 1
    %p82 = por %p80, %p81
    %p84 = scmp.ne.s32.totalorder %s69, %s83
    %p85 = scmp.eq.s32.totalorder %s17, 0
    %p86 = por %p84, %p85
    %s88 = sadd.s32 %s87, 1
    %p91 = scmp.eq.s32.totalorder %s11, 1
    %p92 = scmp.ne.s32.totalorder %s87, %s89
    %p93 = scmp.eq.s32.totalorder %s11, 0
    %p94 = por %p92, %p93
    %p95 = scmp.ne.s32.totalorder %s87, %s89
    %p96 = scmp.eq.s32.totalorder %s16, 1
    %p97 = por %p95, %p96
    %p98 = scmp.ne.s32.totalorder %s89, %s90
    %p99 = scmp.eq.s32.totalorder %s16, 0
    %p100 = por %p98, %p99
    %p101 = scmp.ne.s32.totalorder %s89, %s90
    %p102 = scmp.eq.s32.totalorder %s17, 1
    %p103 = por %p101, %p102
    %p105 = scmp.ne.s32.totalorder %s90, %s104
    %p106 = scmp.eq.s32.totalorder %s17, 0
    %p107 = por %p105, %p106
    %s109 = sadd.s32 %s108, 1
    %p112 = scmp.eq.s32.totalorder %s11, 1
    %p113 = scmp.ne.s32.totalorder %s108, %s110
    %p114 = scmp.eq.s32.totalorder %s11, 0
    %p115 = por %p113, %p114
    %p116 = scmp.ne.s32.totalorder %s108, %s110
    %p117 = scmp.eq.s32.totalorder %s16, 1
    %p118 = por %p116, %p117
    %p119 = scmp.ne.s32.totalorder %s110, %s111
    %p120 = scmp.eq.s32.totalorder %s16, 0
    %p121 = por %p119, %p120
    %p122 = scmp.ne.s32.totalorder %s110, %s111
    %p123 = scmp.eq.s32.totalorder %s17, 1
    %p124 = por %p122, %p123
    %p126 = scmp.ne.s32.totalorder %s111, %s125
    %p127 = scmp.eq.s32.totalorder %s17, 0
    %p128 = por %p126, %p127
    %s129 = ssub.s32 %s11, %s18
    %p130 = scmp.eq.s32.totalorder %s129, 0
    %s132 = sadd.s32 %s131, 1
    %s133 = scalar_select %p130, %s131, %s132
    %p136 = pneg %p130
    %p137 = scmp.eq.s32.totalorder %s11, 1
    %p138 = por %p136, %p137
    %p139 = scmp.ne.s32.totalorder %s131, %s134
    %p140 = scmp.eq.s32.totalorder %s11, 0
    %p141 = por %p139, %p140
    %p142 = scmp.ne.s32.totalorder %s131, %s134
    %p143 = scmp.eq.s32.totalorder %s16, 1
    %p144 = por %p142, %p143
    %p145 = scmp.ne.s32.totalorder %s134, %s135
    %p146 = scmp.eq.s32.totalorder %s16, 0
    %p147 = por %p145, %p146
    %p148 = scmp.ne.s32.totalorder %s134, %s135
    %p149 = scmp.eq.s32.totalorder %s17, 1
    %p150 = por %p148, %p149
    %p152 = scmp.ne.s32.totalorder %s135, %s151
    %p153 = scmp.eq.s32.totalorder %s17, 0
    %p154 = por %p152, %p153
    %p155 = scmp.le.s32.totalorder 1, %s11
    %p156 = scmp.lt.s32.totalorder %s11, 3
    %p157 = pnand %p155, %p156
    %p158 = pneg %p157
    // Predicated region
    $region9: #{tcn_gcn_unit_forward.1} parent=5 // pred_check
      _
    $region10: #{tcn_gcn_unit_forward.1} parent=5 // pred_check_branch
      %160 = sbr.rel (%p157) target = $region12
    $region11: #{tcn_gcn_unit_forward.1} parent=5 // pred_region
      %s161 = ssub.s32 %s11, 1
      // Predicated region
      $region13: #{tcn_gcn_unit_forward.1} parent=11 // pred_check
        %p162 = pneg %p58
      $region14: #{tcn_gcn_unit_forward.1} parent=11 // pred_check_branch
        %164 = sbr.rel (%p162) target = $region16
      $region15: #{tcn_gcn_unit_forward.1} parent=11 // pred_region
        _
      $region16: #{tcn_gcn_unit_forward.1} parent=11 // pred_fallthru
        _
      // Predicated region
      $region17: #{tcn_gcn_unit_forward.1} parent=11 // pred_check
        %p165 = pneg %p79
      $region18: #{tcn_gcn_unit_forward.1} parent=11 // pred_check_branch
        %167 = sbr.rel (%p165) target = $region20
      $region19: #{tcn_gcn_unit_forward.1} parent=11 // pred_region
        _
      $region20: #{tcn_gcn_unit_forward.1} parent=11 // pred_fallthru
        _
      // Predicated region
      $region21: #{tcn_gcn_unit_forward.1} parent=11 // pred_check
        %p168 = pneg %p100
      $region22: #{tcn_gcn_unit_forward.1} parent=11 // pred_check_branch
        %170 = sbr.rel (%p168) target = $region24
      $region23: #{tcn_gcn_unit_forward.1} parent=11 // pred_region
        _
      $region24: #{tcn_gcn_unit_forward.1} parent=11 // pred_fallthru
        _
      // Predicated region
      $region25: #{tcn_gcn_unit_forward.1} parent=11 // pred_check
        %p171 = pneg %p121
      $region26: #{tcn_gcn_unit_forward.1} parent=11 // pred_check_branch
        %173 = sbr.rel (%p171) target = $region28
      $region27: #{tcn_gcn_unit_forward.1} parent=11 // pred_region
        _
      $region28: #{tcn_gcn_unit_forward.1} parent=11 // pred_fallthru
        _
    $region12: #{tcn_gcn_unit_forward.1} parent=5 // pred_fallthru
      _
    %p174 = scmp.lt.s32.totalorder %s11, 2
    // Predicated region
    $region29: #{tcn_gcn_unit_forward.1} parent=5 // pred_check
      %p175 = pneg %p174
    $region30: #{tcn_gcn_unit_forward.1} parent=5 // pred_check_branch
      %177 = sbr.rel (%p175) target = $region32
    $region31: #{tcn_gcn_unit_forward.1} parent=5 // pred_region
      // Predicated region
      $region33: #{tcn_gcn_unit_forward.1} parent=31 // pred_check
        %p178 = pneg %p31
      $region34: #{tcn_gcn_unit_forward.1} parent=31 // pred_check_branch
        %180 = sbr.rel (%p178) target = $region36
      $region35: #{tcn_gcn_unit_forward.1} parent=31 // pred_region
        %s181 = smul.u32 8, %s11
        %p182 = scmp.lt.s32.totalorder %s181, 15
        %s183 = scalar_select %p182, %s181, 15
        %s184 = smul.addr %s183, 2
        %s185 = smul.addr %s184, 4
        %s186 = scalar_lea.vmem %s0, %s185
        %s187 = smul.u32 8, %s11
      $region36: #{tcn_gcn_unit_forward.1} parent=31 // pred_fallthru
        _
    $region32: #{tcn_gcn_unit_forward.1} parent=5 // pred_fallthru
      _
    %p188 = scmp.le.s32.totalorder 1, %s11
    %p189 = scmp.lt.s32.totalorder %s11, 3
    %p190 = pnand %p188, %p189
    %p191 = pneg %p190
    // Predicated region
    $region37: #{tcn_gcn_unit_forward.1} parent=5 // pred_check
      _
    $region38: #{tcn_gcn_unit_forward.1} parent=5 // pred_check_branch
      %193 = sbr.rel (%p190) target = $region40
    $region39: #{tcn_gcn_unit_forward.1} parent=5 // pred_region
      %s194 = ssub.s32 %s11, 1
      %s195 = smul.u32 8, %s16
      %p196 = scmp.lt.s32.totalorder %s195, 15
      %s197 = scalar_select %p196, %s195, 15
      %s198 = smul.addr %s197, 2
      %s199 = smul.addr %s198, 4
      %s200 = scalar_lea.vmem %s0, %s199
      %p201 = pneg %p37
      %p202 = pneg %p34
      %p203 = pneg %p58
      %p204 = pneg %p55
      %p205 = pneg %p79
      %p206 = pneg %p76
      %p207 = pneg %p100
      %p208 = pneg %p97
      %p209 = pneg %p121
      %p210 = pneg %p118
      %p211 = pneg %p147
      %p212 = pneg %p144
      %s213 = smul.u32 8, %s16
      %p214 = scmp.lt.s32.totalorder %s213, 15
      %s215 = scalar_select %p214, %s213, 15
      %s216 = smul.addr %s215, 2
      %s217 = smul.addr %s216, 8
      %s218 = scalar_lea.vmem %s5, %s217
      %s219 = smul.u32 8, %s16
      %p220 = scmp.lt.s32.totalorder %s219, 15
      %s221 = scalar_select %p220, %s219, 15
      %s222 = smul.addr %s221, 2
      %s223 = smul.addr %s222, 4
      %s224 = scalar_lea.vmem %s0, %s223
      %s225 = smul.u32 8, %s16
      %s226 = smul.u32 8, %s16
      %p227 = scmp.lt.s32.totalorder %s226, 15
      %s228 = scalar_select %p227, %s226, 15
      %s229 = smul.addr %s228, 2
      %s230 = smul.addr %s229, 8
      %s231 = scalar_lea.vmem %s5, %s230
      %s232 = smul.u32 8, %s16
      %234 = vst [vmem:[#allocation2] sm:$0xf] 0.0
      %235 = vst [vmem:[#allocation2 + $0x18] sm:$0xf] 0.0
      %236 = vst [vmem:[#allocation2 + $0x30] sm:$0xf] 0.0
      %237 = vst [vmem:[#allocation2 + $0x48] sm:$0xf] 0.0
      %238 = vst [vmem:[#allocation2 + $0x60] sm:$0xf] 0.0
      %239 = vst [vmem:[#allocation2 + $0x78] sm:$0xf] 0.0
      %240 = vst [vmem:[#allocation2 + $0x90] sm:$0xf] 0.0
      %241 = vst [vmem:[#allocation2 + $0xa8] sm:$0xf] 0.0
      %242 = vst [vmem:[#allocation2 + $0x14] sm:$0xf] 0.0
      %243 = vst [vmem:[#allocation2 + $0x2c] sm:$0xf] 0.0
      %244 = vst [vmem:[#allocation2 + $0x44] sm:$0xf] 0.0
      %245 = vst [vmem:[#allocation2 + $0x5c] sm:$0xf] 0.0
      %246 = vst [vmem:[#allocation2 + $0x74] sm:$0xf] 0.0
      %247 = vst [vmem:[#allocation2 + $0x8c] sm:$0xf] 0.0
      %248 = vst [vmem:[#allocation2 + $0xa4] sm:$0xf] 0.0
      %249 = vst [vmem:[#allocation2 + $0xbc] sm:$0xf] 0.0
      %v250 = vld [vmem:[%s224] sm:$0xf]
      %v251 = vld [vmem:[%s224 + $0x4] sm:$0xf]
      %v252 = vld [vmem:[%s224 + $0x8] sm:$0xf]
      %v253 = vld [vmem:[%s224 + $0xc] sm:$0xf]
      %v254 = vld [vmem:[%s224 + $0x10] sm:$0xf]
      %v255 = vld [vmem:[%s224 + $0x14] sm:$0xf]
      %v256 = vld [vmem:[%s224 + $0x18] sm:$0xf]
      %v257 = vld [vmem:[%s224 + $0x1c] sm:$0xf]
      %v258 = vld [vmem:[%s224 + $0x20] sm:$0xf]
      %v259 = vld [vmem:[%s224 + $0x24] sm:$0xf]
      %v260 = vld [vmem:[%s224 + $0x28] sm:$0xf]
      %v261 = vld [vmem:[%s224 + $0x2c] sm:$0xf]
      %v262 = vld [vmem:[%s224 + $0x30] sm:$0xf]
      %v263 = vld [vmem:[%s224 + $0x34] sm:$0xf]
      %v264 = vld [vmem:[%s224 + $0x38] sm:$0xf]
      %v265 = vld [vmem:[%s224 + $0x3c] sm:$0xf]
      %v266 = vld [vmem:[%s1] sm:$0xff]
      %v267 = vld [vmem:[%s1 + $0x8] sm:$0xff]
      %v268 = vld [vmem:[%s1 + $0x10] sm:$0xff]
      %v269 = vld [vmem:[%s1 + $0x18] sm:$0xff]
      %v270 = vld [vmem:[%s1 + $0x20] sm:$0xff]
      %v271 = vld [vmem:[%s1 + $0x28] sm:$0xff]
      %v272 = vld [vmem:[%s1 + $0x30] sm:$0xff]
      %v273 = vld [vmem:[%s1 + $0x38] sm:$0xff]
      %v274 = vld [vmem:[%s2] sm:$0x3]
      %v276 = vlaneseq
      %v277 = vshrl.u32 %v276, 7
      %v278 = vsub.s32 0, %v277
      %v279 = vrot.slane %v274, %v278
      %v280 = vlaneseq
      %v281 = vshrl.u32 %v280, 7
      %v282 = vsub.s32 1, %v281
      %v283 = vrot.slane %v274, %v282
      %v302 = vunpack.c.l.b16 %v250
      %v303 = vunpack.c.l.b16 %v251
      %v304 = vunpack.c.l.b16 %v252
      %v305 = vunpack.c.l.b16 %v253
      %v306 = vunpack.c.l.b16 %v254
      %v307 = vunpack.c.l.b16 %v255
      %v308 = vunpack.c.l.b16 %v256
      %v309 = vunpack.c.l.b16 %v257
      %v310 = vunpack.c.l.b16 %v258
      %v311 = vunpack.c.l.b16 %v259
      %v312 = vunpack.c.l.b16 %v260
      %v313 = vunpack.c.l.b16 %v261
      %v314 = vunpack.c.l.b16 %v262
      %v315 = vunpack.c.l.b16 %v263
      %v316 = vunpack.c.l.b16 %v264
      %v317 = vunpack.c.l.b16 %v265
      %v318 = vpack.c.b16 %v303, %v302
      %v319 = vpack.c.b16 %v305, %v304
      %v320 = vpack.c.b16 %v307, %v306
      %v321 = vpack.c.b16 %v309, %v308
      %v322 = vpack.c.b16 %v311, %v310
      %v323 = vpack.c.b16 %v313, %v312
      %v324 = vpack.c.b16 %v315, %v314
      %v325 = vpack.c.b16 %v317, %v316
      %v334 = vunpack.c.l.b16 %v266
      %v335 = vunpack.c.h.b16 %v266
      %v336 = vunpack.c.l.b16 %v267
      %v337 = vunpack.c.h.b16 %v267
      %v338 = vunpack.c.l.b16 %v268
      %v339 = vunpack.c.h.b16 %v268
      %v340 = vunpack.c.l.b16 %v269
      %v341 = vunpack.c.h.b16 %v269
      %v342 = vunpack.c.l.b16 %v270
      %v343 = vunpack.c.h.b16 %v270
      %v344 = vunpack.c.l.b16 %v271
      %v345 = vunpack.c.h.b16 %v271
      %v346 = vunpack.c.l.b16 %v272
      %v347 = vunpack.c.h.b16 %v272
      %v348 = vunpack.c.l.b16 %v273
      %v349 = vunpack.c.h.b16 %v273
      %v350 = vpack.c.b16 %v336, %v334
      %v351 = vpack.c.b16 %v337, %v335
      %v352 = vpack.c.b16 %v340, %v338
      %v353 = vpack.c.b16 %v341, %v339
      %v354 = vpack.c.b16 %v344, %v342
      %v355 = vpack.c.b16 %v345, %v343
      %v356 = vpack.c.b16 %v348, %v346
      %v357 = vpack.c.b16 %v349, %v347
      %vm366 = vcmask 523264
      %v368 = vsel %vm366, %v318, 0
      %v371 = vsel %vm366, %v319, 0
      %v374 = vsel %vm366, %v320, 0
      %v377 = vsel %vm366, %v321, 0
      %v380 = vsel %vm366, %v322, 0
      %v383 = vsel %vm366, %v323, 0
      %v386 = vsel %vm366, %v324, 0
      %v389 = vsel %vm366, %v325, 0
      %391 = vmatprep.subr.bf16.mxu0 %v351
      %392 = vmatpush1.bf16.msra.mxu0 %v350
      %393 = vmatprep.subr.bf16.mxu0 %v353
      %394 = vmatpush1.bf16.msra.mxu0 %v352
      %395 = vmatprep.subr.bf16.mxu0 %v355
      %396 = vmatpush1.bf16.msra.mxu0 %v354
      %397 = vmatprep.subr.bf16.mxu0 %v357
      %398 = vmatpush1.bf16.msra.mxu0 %v356
      %399 = vmatprep.subr.bf16.mxu0 0
      %400 = vmatpush1.bf16.msra.mxu0 0
      %401 = vmatprep.subr.bf16.mxu0 0
      %402 = vmatpush1.bf16.msra.mxu0 0
      %403 = vmatprep.subr.bf16.mxu0 0
      %404 = vmatpush1.bf16.msra.mxu0 0
      %405 = vmatprep.subr.bf16.mxu0 0
      %406 = vmatpush1.bf16.msra.mxu0 0
      %407 = vmatprep.subr.bf16.mxu0 0
      %408 = vmatpush1.bf16.msra.mxu0 0
      %409 = vmatprep.subr.bf16.mxu0 0
      %410 = vmatpush1.bf16.msra.mxu0 0
      %411 = vmatprep.subr.bf16.mxu0 0
      %412 = vmatpush1.bf16.msra.mxu0 0
      %413 = vmatprep.subr.bf16.mxu0 0
      %414 = vmatpush1.bf16.msra.mxu0 0
      %415 = vmatprep.subr.bf16.mxu0 0
      %416 = vmatpush1.bf16.msra.mxu0 0
      %417 = vmatprep.subr.bf16.mxu0 0
      %418 = vmatpush1.bf16.msra.mxu0 0
      %419 = vmatprep.subr.bf16.mxu0 0
      %420 = vmatpush1.bf16.msra.mxu0 0
      %421 = vmatprep.subr.bf16.mxu0 0
      %422 = vmatpush1.bf16.msra.mxu0 0
      %423 = vmatprep.mubr.bf16.mxu0 0
      %424 = vmatmul.mubr.bf16.gmra.mrb[0].mxu0 %v368
      %v425 = vpop.f32.mrb[0].mxu0
      %v426 = vadd.f32 %v279, %v425
      %v427 = vpop.f32.mrb[0].mxu0
      %v428 = vadd.f32 %v283, %v427
      %v429 = vpop.f32.mrb[0].mxu0
      %v430 = vadd.f32 %v279, %v429
      %v431 = vpop.f32.mrb[0].mxu0
      %v432 = vadd.f32 %v283, %v431
      %433 = vmatprep.mubr.bf16.mxu0 0
      %434 = vmatmul.mubr.bf16.gmra.mrb[0].mxu0 %v371
      %v435 = vpop.f32.mrb[0].mxu0
      %v436 = vadd.f32 %v279, %v435
      %v437 = vpop.f32.mrb[0].mxu0
      %v438 = vadd.f32 %v283, %v437
      %v439 = vpop.f32.mrb[0].mxu0
      %v440 = vadd.f32 %v279, %v439
      %v441 = vpop.f32.mrb[0].mxu0
      %v442 = vadd.f32 %v283, %v441
      %443 = vmatprep.mubr.bf16.mxu0 0
      %444 = vmatmul.mubr.bf16.gmra.mrb[0].mxu0 %v374
      %v445 = vpop.f32.mrb[0].mxu0
      %v446 = vadd.f32 %v279, %v445
      %v447 = vpop.f32.mrb[0].mxu0
      %v448 = vadd.f32 %v283, %v447
      %v449 = vpop.f32.mrb[0].mxu0
      %v450 = vadd.f32 %v279, %v449
      %v451 = vpop.f32.mrb[0].mxu0
      %v452 = vadd.f32 %v283, %v451
      %453 = vmatprep.mubr.bf16.mxu0 0
      %454 = vmatmul.mubr.bf16.gmra.mrb[0].mxu0 %v377
      %v455 = vpop.f32.mrb[0].mxu0
      %v456 = vadd.f32 %v279, %v455
      %v457 = vpop.f32.mrb[0].mxu0
      %v458 = vadd.f32 %v283, %v457
      %v459 = vpop.f32.mrb[0].mxu0
      %v460 = vadd.f32 %v279, %v459
      %v461 = vpop.f32.mrb[0].mxu0
      %v462 = vadd.f32 %v283, %v461
      %463 = vmatprep.mubr.bf16.mxu0 0
      %464 = vmatmul.mubr.bf16.gmra.mrb[0].mxu0 %v380
      %v465 = vpop.f32.mrb[0].mxu0
      %v466 = vadd.f32 %v279, %v465
      %v467 = vpop.f32.mrb[0].mxu0
      %v468 = vadd.f32 %v283, %v467
      %v469 = vpop.f32.mrb[0].mxu0
      %v470 = vadd.f32 %v279, %v469
      %v471 = vpop.f32.mrb[0].mxu0
      %v472 = vadd.f32 %v283, %v471
      %473 = vmatprep.mubr.bf16.mxu0 0
      %474 = vmatmul.mubr.bf16.gmra.mrb[0].mxu0 %v383
      %v475 = vpop.f32.mrb[0].mxu0
      %v476 = vadd.f32 %v279, %v475
      %v477 = vpop.f32.mrb[0].mxu0
      %v478 = vadd.f32 %v283, %v477
      %v479 = vpop.f32.mrb[0].mxu0
      %v480 = vadd.f32 %v279, %v479
      %v481 = vpop.f32.mrb[0].mxu0
      %v482 = vadd.f32 %v283, %v481
      %483 = vmatprep.mubr.bf16.mxu0 0
      %484 = vmatmul.mubr.bf16.gmra.mrb[0].mxu0 %v386
      %v485 = vpop.f32.mrb[0].mxu0
      %v486 = vadd.f32 %v279, %v485
      %v487 = vpop.f32.mrb[0].mxu0
      %v488 = vadd.f32 %v283, %v487
      %v489 = vpop.f32.mrb[0].mxu0
      %v490 = vadd.f32 %v279, %v489
      %v491 = vpop.f32.mrb[0].mxu0
      %v492 = vadd.f32 %v283, %v491
      %493 = vmatprep.mubr.bf16.mxu0 0
      %494 = vmatmul.mubr.bf16.gmra.mrb[0].mxu0 %v389
      %v495 = vpop.f32.mrb[0].mxu0
      %v496 = vadd.f32 %v279, %v495
      %v497 = vpop.f32.mrb[0].mxu0
      %v498 = vadd.f32 %v283, %v497
      %v499 = vpop.f32.mrb[0].mxu0
      %v500 = vadd.f32 %v279, %v499
      %v501 = vpop.f32.mrb[0].mxu0
      %v502 = vadd.f32 %v283, %v501
      %503 = vdwg.mxu0
      %v504 = vmax.f32 %v426, 0.0
      %v505 = vmax.f32 %v428, 0.0
      %v506 = vmax.f32 %v430, 0.0
      %v507 = vmax.f32 %v432, 0.0
      %v508 = vmax.f32 %v436, 0.0
      %v509 = vmax.f32 %v438, 0.0
      %v510 = vmax.f32 %v440, 0.0
      %v511 = vmax.f32 %v442, 0.0
      %v512 = vmax.f32 %v446, 0.0
      %v513 = vmax.f32 %v448, 0.0
      %v514 = vmax.f32 %v450, 0.0
      %v515 = vmax.f32 %v452, 0.0
      %v516 = vmax.f32 %v456, 0.0
      %v517 = vmax.f32 %v458, 0.0
      %v518 = vmax.f32 %v460, 0.0
      %v519 = vmax.f32 %v462, 0.0
      %v520 = vmax.f32 %v466, 0.0
      %v521 = vmax.f32 %v468, 0.0
      %v522 = vmax.f32 %v470, 0.0
      %v523 = vmax.f32 %v472, 0.0
      %v524 = vmax.f32 %v476, 0.0
      %v525 = vmax.f32 %v478, 0.0
      %v526 = vmax.f32 %v480, 0.0
      %v527 = vmax.f32 %v482, 0.0
      %v528 = vmax.f32 %v486, 0.0
      %v529 = vmax.f32 %v488, 0.0
      %v530 = vmax.f32 %v490, 0.0
      %v531 = vmax.f32 %v492, 0.0
      %v532 = vmax.f32 %v496, 0.0
      %v533 = vmax.f32 %v498, 0.0
      %v534 = vmax.f32 %v500, 0.0
      %v535 = vmax.f32 %v502, 0.0
      %536 = vst [vmem:[#allocation2 + $0x4] sm:$0xff] %v504
      %537 = vst [vmem:[#allocation2 + $0xc] sm:$0xff] %v506
      %538 = vst [vmem:[#allocation2 + $0x1c] sm:$0xff] %v508
      %539 = vst [vmem:[#allocation2 + $0x24] sm:$0xff] %v510
      %540 = vst [vmem:[#allocation2 + $0x34] sm:$0xff] %v512
      %541 = vst [vmem:[#allocation2 + $0x3c] sm:$0xff] %v514
      %542 = vst [vmem:[#allocation2 + $0x4c] sm:$0xff] %v516
      %543 = vst [vmem:[#allocation2 + $0x54] sm:$0xff] %v518
      %544 = vst [vmem:[#allocation2 + $0x64] sm:$0xff] %v520
      %545 = vst [vmem:[#allocation2 + $0x6c] sm:$0xff] %v522
      %546 = vst [vmem:[#allocation2 + $0x7c] sm:$0xff] %v524
      %547 = vst [vmem:[#allocation2 + $0x84] sm:$0xff] %v526
      %548 = vst [vmem:[#allocation2 + $0x94] sm:$0xff] %v528
      %549 = vst [vmem:[#allocation2 + $0x9c] sm:$0xff] %v530
      %550 = vst [vmem:[#allocation2 + $0xac] sm:$0xff] %v532
      %551 = vst [vmem:[#allocation2 + $0xb4] sm:$0xff] %v534
      %v552 = vld [vmem:[#allocation2] sm:$0xff]
      %v553 = vld [vmem:[#allocation2 + $0x8] sm:$0xff]
      %v554 = vld [vmem:[#allocation2 + $0x18] sm:$0xff]
      %v555 = vld [vmem:[#allocation2 + $0x20] sm:$0xff]
      %v556 = vld [vmem:[#allocation2 + $0x30] sm:$0xff]
      %v557 = vld [vmem:[#allocation2 + $0x38] sm:$0xff]
      %v558 = vld [vmem:[#allocation2 + $0x48] sm:$0xff]
      %v559 = vld [vmem:[#allocation2 + $0x50] sm:$0xff]
      %v560 = vld [vmem:[#allocation2 + $0x60] sm:$0xff]
      %v561 = vld [vmem:[#allocation2 + $0x68] sm:$0xff]
      %v562 = vld [vmem:[#allocation2 + $0x78] sm:$0xff]
      %v563 = vld [vmem:[#allocation2 + $0x80] sm:$0xff]
      %v564 = vld [vmem:[#allocation2 + $0x90] sm:$0xff]
      %v565 = vld [vmem:[#allocation2 + $0x98] sm:$0xff]
      %v566 = vld [vmem:[#allocation2 + $0xa8] sm:$0xff]
      %v567 = vld [vmem:[#allocation2 + $0xb0] sm:$0xff]
      %v568 = vpack.c.bf16 %v553, %v552
      %v569 = vpack.c.bf16 %v555, %v554
      %v570 = vpack.c.bf16 %v557, %v556
      %v571 = vpack.c.bf16 %v559, %v558
      %v572 = vpack.c.bf16 %v561, %v560
      %v573 = vpack.c.bf16 %v563, %v562
      %v574 = vpack.c.bf16 %v565, %v564
      %v575 = vpack.c.bf16 %v567, %v566
      %v576 = vld [vmem:[#allocation2 + $0x1] sm:$0xff]
      %v577 = vld [vmem:[#allocation2 + $0x9] sm:$0xff]
      %v578 = vld [vmem:[#allocation2 + $0x19] sm:$0xff]
      %v579 = vld [vmem:[#allocation2 + $0x21] sm:$0xff]
      %v580 = vld [vmem:[#allocation2 + $0x31] sm:$0xff]
      %v581 = vld [vmem:[#allocation2 + $0x39] sm:$0xff]
      %v582 = vld [vmem:[#allocation2 + $0x49] sm:$0xff]
      %v583 = vld [vmem:[#allocation2 + $0x51] sm:$0xff]
      %v584 = vld [vmem:[#allocation2 + $0x61] sm:$0xff]
      %v585 = vld [vmem:[#allocation2 + $0x69] sm:$0xff]
      %v586 = vld [vmem:[#allocation2 + $0x79] sm:$0xff]
      %v587 = vld [vmem:[#allocation2 + $0x81] sm:$0xff]
      %v588 = vld [vmem:[#allocation2 + $0x91] sm:$0xff]
      %v589 = vld [vmem:[#allocation2 + $0x99] sm:$0xff]
      %v590 = vld [vmem:[#allocation2 + $0xa9] sm:$0xff]
      %v591 = vld [vmem:[#allocation2 + $0xb1] sm:$0xff]
      %v592 = vpack.c.bf16 %v577, %v576
      %v593 = vpack.c.bf16 %v579, %v578
      %v594 = vpack.c.bf16 %v581, %v580
      %v595 = vpack.c.bf16 %v583, %v582
      %v596 = vpack.c.bf16 %v585, %v584
      %v597 = vpack.c.bf16 %v587, %v586
      %v598 = vpack.c.bf16 %v589, %v588
      %v599 = vpack.c.bf16 %v591, %v590
      %v600 = vld [vmem:[#allocation2 + $0x2] sm:$0xff]
      %v601 = vld [vmem:[#allocation2 + $0xa] sm:$0xff]
      %v602 = vld [vmem:[#allocation2 + $0x1a] sm:$0xff]
      %v603 = vld [vmem:[#allocation2 + $0x22] sm:$0xff]
      %v604 = vld [vmem:[#allocation2 + $0x32] sm:$0xff]
      %v605 = vld [vmem:[#allocation2 + $0x3a] sm:$0xff]
      %v606 = vld [vmem:[#allocation2 + $0x4a] sm:$0xff]
      %v607 = vld [vmem:[#allocation2 + $0x52] sm:$0xff]
      %v608 = vld [vmem:[#allocation2 + $0x62] sm:$0xff]
      %v609 = vld [vmem:[#allocation2 + $0x6a] sm:$0xff]
      %v610 = vld [vmem:[#allocation2 + $0x7a] sm:$0xff]
      %v611 = vld [vmem:[#allocation2 + $0x82] sm:$0xff]
      %v612 = vld [vmem:[#allocation2 + $0x92] sm:$0xff]
      %v613 = vld [vmem:[#allocation2 + $0x9a] sm:$0xff]
      %v614 = vld [vmem:[#allocation2 + $0xaa] sm:$0xff]
      %v615 = vld [vmem:[#allocation2 + $0xb2] sm:$0xff]
      %v616 = vpack.c.bf16 %v601, %v600
      %v617 = vpack.c.bf16 %v603, %v602
      %v618 = vpack.c.bf16 %v605, %v604
      %v619 = vpack.c.bf16 %v607, %v606
      %v620 = vpack.c.bf16 %v609, %v608
      %v621 = vpack.c.bf16 %v611, %v610
      %v622 = vpack.c.bf16 %v613, %v612
      %v623 = vpack.c.bf16 %v615, %v614
      %v624 = vld [vmem:[#allocation2 + $0x3] sm:$0xff]
      %v625 = vld [vmem:[#allocation2 + $0xb] sm:$0xff]
      %v626 = vld [vmem:[#allocation2 + $0x1b] sm:$0xff]
      %v627 = vld [vmem:[#allocation2 + $0x23] sm:$0xff]
      %v628 = vld [vmem:[#allocation2 + $0x33] sm:$0xff]
      %v629 = vld [vmem:[#allocation2 + $0x3b] sm:$0xff]
      %v630 = vld [vmem:[#allocation2 + $0x4b] sm:$0xff]
      %v631 = vld [vmem:[#allocation2 + $0x53] sm:$0xff]
      %v632 = vld [vmem:[#allocation2 + $0x63] sm:$0xff]
      %v633 = vld [vmem:[#allocation2 + $0x6b] sm:$0xff]
      %v634 = vld [vmem:[#allocation2 + $0x7b] sm:$0xff]
      %v635 = vld [vmem:[#allocation2 + $0x83] sm:$0xff]
      %v636 = vld [vmem:[#allocation2 + $0x93] sm:$0xff]
      %v637 = vld [vmem:[#allocation2 + $0x9b] sm:$0xff]
      %v638 = vld [vmem:[#allocation2 + $0xab] sm:$0xff]
      %v639 = vld [vmem:[#allocation2 + $0xb3] sm:$0xff]
      %v640 = vpack.c.bf16 %v625, %v624
      %v641 = vpack.c.bf16 %v627, %v626
      %v642 = vpack.c.bf16 %v629, %v628
      %v643 = vpack.c.bf16 %v631, %v630
      %v644 = vpack.c.bf16 %v633, %v632
      %v645 = vpack.c.bf16 %v635, %v634
      %v646 = vpack.c.bf16 %v637, %v636
      %v647 = vpack.c.bf16 %v639, %v638
      %v648 = vld [vmem:[#allocation2 + $0x4] sm:$0xff]
      %v649 = vld [vmem:[#allocation2 + $0xc] sm:$0xff]
      %v650 = vld [vmem:[#allocation2 + $0x1c] sm:$0xff]
      %v651 = vld [vmem:[#allocation2 + $0x24] sm:$0xff]
      %v652 = vld [vmem:[#allocation2 + $0x34] sm:$0xff]
      %v653 = vld [vmem:[#allocation2 + $0x3c] sm:$0xff]
      %v654 = vld [vmem:[#allocation2 + $0x4c] sm:$0xff]
      %v655 = vld [vmem:[#allocation2 + $0x54] sm:$0xff]
      %v656 = vld [vmem:[#allocation2 + $0x64] sm:$0xff]
      %v657 = vld [vmem:[#allocation2 + $0x6c] sm:$0xff]
      %v658 = vld [vmem:[#allocation2 + $0x7c] sm:$0xff]
      %v659 = vld [vmem:[#allocation2 + $0x84] sm:$0xff]
      %v660 = vld [vmem:[#allocation2 + $0x94] sm:$0xff]
      %v661 = vld [vmem:[#allocation2 + $0x9c] sm:$0xff]
      %v662 = vld [vmem:[#allocation2 + $0xac] sm:$0xff]
      %v663 = vld [vmem:[#allocation2 + $0xb4] sm:$0xff]
      %v664 = vpack.c.bf16 %v649, %v648
      %v665 = vpack.c.bf16 %v651, %v650
      %v666 = vpack.c.bf16 %v653, %v652
      %v667 = vpack.c.bf16 %v655, %v654
      %v668 = vpack.c.bf16 %v657, %v656
      %v669 = vpack.c.bf16 %v659, %v658
      %v670 = vpack.c.bf16 %v661, %v660
      %v671 = vpack.c.bf16 %v663, %v662
      %v672 = vld [vmem:[#allocation2 + $0x5] sm:$0xff]
      %v673 = vld [vmem:[#allocation2 + $0xd] sm:$0xff]
      %v674 = vld [vmem:[#allocation2 + $0x1d] sm:$0xff]
      %v675 = vld [vmem:[#allocation2 + $0x25] sm:$0xff]
      %v676 = vld [vmem:[#allocation2 + $0x35] sm:$0xff]
      %v677 = vld [vmem:[#allocation2 + $0x3d] sm:$0xff]
      %v678 = vld [vmem:[#allocation2 + $0x4d] sm:$0xff]
      %v679 = vld [vmem:[#allocation2 + $0x55] sm:$0xff]
      %v680 = vld [vmem:[#allocation2 + $0x65] sm:$0xff]
      %v681 = vld [vmem:[#allocation2 + $0x6d] sm:$0xff]
      %v682 = vld [vmem:[#allocation2 + $0x7d] sm:$0xff]
      %v683 = vld [vmem:[#allocation2 + $0x85] sm:$0xff]
      %v684 = vld [vmem:[#allocation2 + $0x95] sm:$0xff]
      %v685 = vld [vmem:[#allocation2 + $0x9d] sm:$0xff]
      %v686 = vld [vmem:[#allocation2 + $0xad] sm:$0xff]
      %v687 = vld [vmem:[#allocation2 + $0xb5] sm:$0xff]
      %v688 = vpack.c.bf16 %v673, %v672
      %v689 = vpack.c.bf16 %v675, %v674
      %v690 = vpack.c.bf16 %v677, %v676
      %v691 = vpack.c.bf16 %v679, %v678
      %v692 = vpack.c.bf16 %v681, %v680
      %v693 = vpack.c.bf16 %v683, %v682
      %v694 = vpack.c.bf16 %v685, %v684
      %v695 = vpack.c.bf16 %v687, %v686
      %v696 = vld [vmem:[#allocation2 + $0x6] sm:$0xff]
      %v697 = vld [vmem:[#allocation2 + $0xe] sm:$0xff]
      %v698 = vld [vmem:[#allocation2 + $0x1e] sm:$0xff]
      %v699 = vld [vmem:[#allocation2 + $0x26] sm:$0xff]
      %v700 = vld [vmem:[#allocation2 + $0x36] sm:$0xff]
      %v701 = vld [vmem:[#allocation2 + $0x3e] sm:$0xff]
      %v702 = vld [vmem:[#allocation2 + $0x4e] sm:$0xff]
      %v703 = vld [vmem:[#allocation2 + $0x56] sm:$0xff]
      %v704 = vld [vmem:[#allocation2 + $0x66] sm:$0xff]
      %v705 = vld [vmem:[#allocation2 + $0x6e] sm:$0xff]
      %v706 = vld [vmem:[#allocation2 + $0x7e] sm:$0xff]
      %v707 = vld [vmem:[#allocation2 + $0x86] sm:$0xff]
      %v708 = vld [vmem:[#allocation2 + $0x96] sm:$0xff]
      %v709 = vld [vmem:[#allocation2 + $0x9e] sm:$0xff]
      %v710 = vld [vmem:[#allocation2 + $0xae] sm:$0xff]
      %v711 = vld [vmem:[#allocation2 + $0xb6] sm:$0xff]
      %v712 = vpack.c.bf16 %v697, %v696
      %v713 = vpack.c.bf16 %v699, %v698
      %v714 = vpack.c.bf16 %v701, %v700
      %v715 = vpack.c.bf16 %v703, %v702
      %v716 = vpack.c.bf16 %v705, %v704
      %v717 = vpack.c.bf16 %v707, %v706
      %v718 = vpack.c.bf16 %v709, %v708
      %v719 = vpack.c.bf16 %v711, %v710
      %v720 = vld [vmem:[#allocation2 + $0x7] sm:$0xff]
      %v721 = vld [vmem:[#allocation2 + $0xf] sm:$0xff]
      %v722 = vld [vmem:[#allocation2 + $0x1f] sm:$0xff]
      %v723 = vld [vmem:[#allocation2 + $0x27] sm:$0xff]
      %v724 = vld [vmem:[#allocation2 + $0x37] sm:$0xff]
      %v725 = vld [vmem:[#allocation2 + $0x3f] sm:$0xff]
      %v726 = vld [vmem:[#allocation2 + $0x4f] sm:$0xff]
      %v727 = vld [vmem:[#allocation2 + $0x57] sm:$0xff]
      %v728 = vld [vmem:[#allocation2 + $0x67] sm:$0xff]
      %v729 = vld [vmem:[#allocation2 + $0x6f] sm:$0xff]
      %v730 = vld [vmem:[#allocation2 + $0x7f] sm:$0xff]
      %v731 = vld [vmem:[#allocation2 + $0x87] sm:$0xff]
      %v732 = vld [vmem:[#allocation2 + $0x97] sm:$0xff]
      %v733 = vld [vmem:[#allocation2 + $0x9f] sm:$0xff]
      %v734 = vld [vmem:[#allocation2 + $0xaf] sm:$0xff]
      %v735 = vld [vmem:[#allocation2 + $0xb7] sm:$0xff]
      %v736 = vpack.c.bf16 %v721, %v720
      %v737 = vpack.c.bf16 %v723, %v722
      %v738 = vpack.c.bf16 %v725, %v724
      %v739 = vpack.c.bf16 %v727, %v726
      %v740 = vpack.c.bf16 %v729, %v728
      %v741 = vpack.c.bf16 %v731, %v730
      %v742 = vpack.c.bf16 %v733, %v732
      %v743 = vpack.c.bf16 %v735, %v734
      %v744 = vld [vmem:[#allocation2 + $0x8] sm:$0xff]
      %v745 = vld [vmem:[#allocation2 + $0x10] sm:$0xff]
      %v746 = vld [vmem:[#allocation2 + $0x20] sm:$0xff]
      %v747 = vld [vmem:[#allocation2 + $0x28] sm:$0xff]
      %v748 = vld [vmem:[#allocation2 + $0x38] sm:$0xff]
      %v749 = vld [vmem:[#allocation2 + $0x40] sm:$0xff]
      %v750 = vld [vmem:[#allocation2 + $0x50] sm:$0xff]
      %v751 = vld [vmem:[#allocation2 + $0x58] sm:$0xff]
      %v752 = vld [vmem:[#allocation2 + $0x68] sm:$0xff]
      %v753 = vld [vmem:[#allocation2 + $0x70] sm:$0xff]
      %v754 = vld [vmem:[#allocation2 + $0x80] sm:$0xff]
      %v755 = vld [vmem:[#allocation2 + $0x88] sm:$0xff]
      %v756 = vld [vmem:[#allocation2 + $0x98] sm:$0xff]
      %v757 = vld [vmem:[#allocation2 + $0xa0] sm:$0xff]
      %v758 = vld [vmem:[#allocation2 + $0xb0] sm:$0xff]
      %v759 = vld [vmem:[#allocation2 + $0xb8] sm:$0xff]
      %v760 = vpack.c.bf16 %v745, %v744
      %v761 = vpack.c.bf16 %v747, %v746
      %v762 = vpack.c.bf16 %v749, %v748
      %v763 = vpack.c.bf16 %v751, %v750
      %v764 = vpack.c.bf16 %v753, %v752
      %v765 = vpack.c.bf16 %v755, %v754
      %v766 = vpack.c.bf16 %v757, %v756
      %v767 = vpack.c.bf16 %v759, %v758
      %v768 = vld [vmem:[%s3] sm:$0xf]
      %v769 = vld [vmem:[%s3 + $0x4] sm:$0xf]
      %v770 = vld [vmem:[%s3 + $0x8] sm:$0xf]
      %v771 = vld [vmem:[%s3 + $0xc] sm:$0xf]
      %v772 = vld [vmem:[%s3 + $0x10] sm:$0xf]
      %v773 = vld [vmem:[%s3 + $0x14] sm:$0xf]
      %v774 = vld [vmem:[%s3 + $0x18] sm:$0xf]
      %v775 = vld [vmem:[%s3 + $0x1c] sm:$0xf]
      %v776 = vld [vmem:[%s3 + $0x20] sm:$0xf]
      %v777 = vld [vmem:[%s3 + $0x24] sm:$0xf]
      %v778 = vld [vmem:[%s3 + $0x28] sm:$0xf]
      %v779 = vld [vmem:[%s3 + $0x2c] sm:$0xf]
      %v780 = vld [vmem:[%s3 + $0x30] sm:$0xf]
      %v781 = vld [vmem:[%s3 + $0x34] sm:$0xf]
      %v782 = vld [vmem:[%s3 + $0x38] sm:$0xf]
      %v783 = vld [vmem:[%s3 + $0x3c] sm:$0xf]
      %v784 = vld [vmem:[%s3 + $0x40] sm:$0xf]
      %v785 = vld [vmem:[%s3 + $0x44] sm:$0xf]
      %v786 = vld [vmem:[%s3 + $0x48] sm:$0xf]
      %v787 = vld [vmem:[%s3 + $0x4c] sm:$0xf]
      %v788 = vld [vmem:[%s3 + $0x50] sm:$0xf]
      %v789 = vld [vmem:[%s3 + $0x54] sm:$0xf]
      %v790 = vld [vmem:[%s3 + $0x58] sm:$0xf]
      %v791 = vld [vmem:[%s3 + $0x5c] sm:$0xf]
      %v792 = vld [vmem:[%s3 + $0x60] sm:$0xf]
      %v793 = vld [vmem:[%s3 + $0x64] sm:$0xf]
      %v794 = vld [vmem:[%s3 + $0x68] sm:$0xf]
      %v795 = vld [vmem:[%s3 + $0x6c] sm:$0xf]
      %v796 = vld [vmem:[%s3 + $0x70] sm:$0xf]
      %v797 = vld [vmem:[%s3 + $0x74] sm:$0xf]
      %v798 = vld [vmem:[%s3 + $0x78] sm:$0xf]
      %v799 = vld [vmem:[%s3 + $0x7c] sm:$0xf]
      %v800 = vld [vmem:[%s3 + $0x80] sm:$0xf]
      %v801 = vld [vmem:[%s3 + $0x84] sm:$0xf]
      %v802 = vld [vmem:[%s3 + $0x88] sm:$0xf]
      %v803 = vld [vmem:[%s3 + $0x8c] sm:$0xf]
      %v804 = vld [vmem:[%s3 + $0x90] sm:$0xf]
      %v805 = vld [vmem:[%s3 + $0x94] sm:$0xf]
      %v806 = vld [vmem:[%s3 + $0x98] sm:$0xf]
      %v807 = vld [vmem:[%s3 + $0x9c] sm:$0xf]
      %v808 = vld [vmem:[%s3 + $0xa0] sm:$0xf]
      %v809 = vld [vmem:[%s3 + $0xa4] sm:$0xf]
      %v810 = vld [vmem:[%s3 + $0xa8] sm:$0xf]
      %v811 = vld [vmem:[%s3 + $0xac] sm:$0xf]
      %v812 = vld [vmem:[%s3 + $0xb0] sm:$0xf]
      %v813 = vld [vmem:[%s3 + $0xb4] sm:$0xf]
      %v814 = vld [vmem:[%s3 + $0xb8] sm:$0xf]
      %v815 = vld [vmem:[%s3 + $0xbc] sm:$0xf]
      %v816 = vld [vmem:[%s3 + $0xc0] sm:$0xf]
      %v817 = vld [vmem:[%s3 + $0xc4] sm:$0xf]
      %v818 = vld [vmem:[%s3 + $0xc8] sm:$0xf]
      %v819 = vld [vmem:[%s3 + $0xcc] sm:$0xf]
      %v820 = vld [vmem:[%s3 + $0xd0] sm:$0xf]
      %v821 = vld [vmem:[%s3 + $0xd4] sm:$0xf]
      %v822 = vld [vmem:[%s3 + $0xd8] sm:$0xf]
      %v823 = vld [vmem:[%s3 + $0xdc] sm:$0xf]
      %v824 = vld [vmem:[%s3 + $0xe0] sm:$0xf]
      %v825 = vld [vmem:[%s3 + $0xe4] sm:$0xf]
      %v826 = vld [vmem:[%s3 + $0xe8] sm:$0xf]
      %v827 = vld [vmem:[%s3 + $0xec] sm:$0xf]
      %v828 = vld [vmem:[%s3 + $0xf0] sm:$0xf]
      %v829 = vld [vmem:[%s3 + $0xf4] sm:$0xf]
      %v830 = vld [vmem:[%s3 + $0xf8] sm:$0xf]
      %v831 = vld [vmem:[%s3 + $0xfc] sm:$0xf]
      %v832 = vld [vmem:[%s3 + $0x100] sm:$0xf]
      %v833 = vld [vmem:[%s3 + $0x104] sm:$0xf]
      %v834 = vld [vmem:[%s3 + $0x108] sm:$0xf]
      %v835 = vld [vmem:[%s3 + $0x10c] sm:$0xf]
      %v836 = vld [vmem:[%s3 + $0x110] sm:$0xf]
      %v837 = vld [vmem:[%s3 + $0x114] sm:$0xf]
      %v838 = vld [vmem:[%s3 + $0x118] sm:$0xf]
      %v839 = vld [vmem:[%s3 + $0x11c] sm:$0xf]
      %v840 = vld [vmem:[%s3 + $0x120] sm:$0xf]
      %v841 = vld [vmem:[%s3 + $0x124] sm:$0xf]
      %v842 = vld [vmem:[%s3 + $0x128] sm:$0xf]
      %v843 = vld [vmem:[%s3 + $0x12c] sm:$0xf]
      %v844 = vld [vmem:[%s3 + $0x130] sm:$0xf]
      %v845 = vld [vmem:[%s3 + $0x134] sm:$0xf]
      %v846 = vld [vmem:[%s3 + $0x138] sm:$0xf]
      %v847 = vld [vmem:[%s3 + $0x13c] sm:$0xf]
      %v848 = vld [vmem:[%s3 + $0x140] sm:$0xf]
      %v849 = vld [vmem:[%s3 + $0x144] sm:$0xf]
      %v850 = vld [vmem:[%s3 + $0x148] sm:$0xf]
      %v851 = vld [vmem:[%s3 + $0x14c] sm:$0xf]
      %v852 = vld [vmem:[%s3 + $0x150] sm:$0xf]
      %v853 = vld [vmem:[%s3 + $0x154] sm:$0xf]
      %v854 = vld [vmem:[%s3 + $0x158] sm:$0xf]
      %v855 = vld [vmem:[%s3 + $0x15c] sm:$0xf]
      %v856 = vld [vmem:[%s3 + $0x160] sm:$0xf]
      %v857 = vld [vmem:[%s3 + $0x164] sm:$0xf]
      %v858 = vld [vmem:[%s3 + $0x168] sm:$0xf]
      %v859 = vld [vmem:[%s3 + $0x16c] sm:$0xf]
      %v860 = vld [vmem:[%s3 + $0x170] sm:$0xf]
      %v861 = vld [vmem:[%s3 + $0x174] sm:$0xf]
      %v862 = vld [vmem:[%s3 + $0x178] sm:$0xf]
      %v863 = vld [vmem:[%s3 + $0x17c] sm:$0xf]
      %v864 = vld [vmem:[%s3 + $0x180] sm:$0xf]
      %v865 = vld [vmem:[%s3 + $0x184] sm:$0xf]
      %v866 = vld [vmem:[%s3 + $0x188] sm:$0xf]
      %v867 = vld [vmem:[%s3 + $0x18c] sm:$0xf]
      %v868 = vld [vmem:[%s3 + $0x190] sm:$0xf]
      %v869 = vld [vmem:[%s3 + $0x194] sm:$0xf]
      %v870 = vld [vmem:[%s3 + $0x198] sm:$0xf]
      %v871 = vld [vmem:[%s3 + $0x19c] sm:$0xf]
      %v872 = vld [vmem:[%s3 + $0x1a0] sm:$0xf]
      %v873 = vld [vmem:[%s3 + $0x1a4] sm:$0xf]
      %v874 = vld [vmem:[%s3 + $0x1a8] sm:$0xf]
      %v875 = vld [vmem:[%s3 + $0x1ac] sm:$0xf]
      %v876 = vld [vmem:[%s3 + $0x1b0] sm:$0xf]
      %v877 = vld [vmem:[%s3 + $0x1b4] sm:$0xf]
      %v878 = vld [vmem:[%s3 + $0x1b8] sm:$0xf]
      %v879 = vld [vmem:[%s3 + $0x1bc] sm:$0xf]
      %v880 = vld [vmem:[%s3 + $0x1c0] sm:$0xf]
      %v881 = vld [vmem:[%s3 + $0x1c4] sm:$0xf]
      %v882 = vld [vmem:[%s3 + $0x1c8] sm:$0xf]
      %v883 = vld [vmem:[%s3 + $0x1cc] sm:$0xf]
      %v884 = vld [vmem:[%s3 + $0x1d0] sm:$0xf]
      %v885 = vld [vmem:[%s3 + $0x1d4] sm:$0xf]
      %v886 = vld [vmem:[%s3 + $0x1d8] sm:$0xf]
      %v887 = vld [vmem:[%s3 + $0x1dc] sm:$0xf]
      %v888 = vld [vmem:[%s3 + $0x1e0] sm:$0xf]
      %v889 = vld [vmem:[%s3 + $0x1e4] sm:$0xf]
      %v890 = vld [vmem:[%s3 + $0x1e8] sm:$0xf]
      %v891 = vld [vmem:[%s3 + $0x1ec] sm:$0xf]
      %v892 = vld [vmem:[%s3 + $0x1f0] sm:$0xf]
      %v893 = vld [vmem:[%s3 + $0x1f4] sm:$0xf]
      %v894 = vld [vmem:[%s3 + $0x1f8] sm:$0xf]
      %v895 = vld [vmem:[%s3 + $0x1fc] sm:$0xf]
      %v896 = vld [vmem:[%s3 + $0x200] sm:$0xf]
      %v897 = vld [vmem:[%s3 + $0x204] sm:$0xf]
      %v898 = vld [vmem:[%s3 + $0x208] sm:$0xf]
      %v899 = vld [vmem:[%s3 + $0x20c] sm:$0xf]
      %v900 = vld [vmem:[%s3 + $0x210] sm:$0xf]
      %v901 = vld [vmem:[%s3 + $0x214] sm:$0xf]
      %v902 = vld [vmem:[%s3 + $0x218] sm:$0xf]
      %v903 = vld [vmem:[%s3 + $0x21c] sm:$0xf]
      %v904 = vld [vmem:[%s3 + $0x220] sm:$0xf]
      %v905 = vld [vmem:[%s3 + $0x224] sm:$0xf]
      %v906 = vld [vmem:[%s3 + $0x228] sm:$0xf]
      %v907 = vld [vmem:[%s3 + $0x22c] sm:$0xf]
      %v908 = vld [vmem:[%s3 + $0x230] sm:$0xf]
      %v909 = vld [vmem:[%s3 + $0x234] sm:$0xf]
      %v910 = vld [vmem:[%s3 + $0x238] sm:$0xf]
      %v911 = vld [vmem:[%s3 + $0x23c] sm:$0xf]
      %v912 = vld [vmem:[%s4] sm:$0x1]
      %v914 = vlaneseq
      %v915 = vshrl.u32 %v914, 7
      %v916 = vsub.s32 0, %v915
      %v917 = vrot.slane %v912, %v916
      %v1063 = vunpack.c.l.b16 %v768
      %v1064 = vunpack.c.l.b16 %v769
      %v1065 = vunpack.c.l.b16 %v770
      %v1066 = vunpack.c.l.b16 %v771
      %v1067 = vunpack.c.l.b16 %v772
      %v1068 = vunpack.c.l.b16 %v773
      %v1069 = vunpack.c.l.b16 %v774
      %v1070 = vunpack.c.l.b16 %v775
      %v1071 = vunpack.c.l.b16 %v776
      %v1072 = vunpack.c.l.b16 %v777
      %v1073 = vunpack.c.l.b16 %v778
      %v1074 = vunpack.c.l.b16 %v779
      %v1075 = vunpack.c.l.b16 %v780
      %v1076 = vunpack.c.l.b16 %v781
      %v1077 = vunpack.c.l.b16 %v782
      %v1078 = vunpack.c.l.b16 %v783
      %v1079 = vunpack.c.l.b16 %v784
      %v1080 = vunpack.c.l.b16 %v785
      %v1081 = vunpack.c.l.b16 %v786
      %v1082 = vunpack.c.l.b16 %v787
      %v1083 = vunpack.c.l.b16 %v788
      %v1084 = vunpack.c.l.b16 %v789
      %v1085 = vunpack.c.l.b16 %v790
      %v1086 = vunpack.c.l.b16 %v791
      %v1087 = vunpack.c.l.b16 %v792
      %v1088 = vunpack.c.l.b16 %v793
      %v1089 = vunpack.c.l.b16 %v794
      %v1090 = vunpack.c.l.b16 %v795
      %v1091 = vunpack.c.l.b16 %v796
      %v1092 = vunpack.c.l.b16 %v797
      %v1093 = vunpack.c.l.b16 %v798
      %v1094 = vunpack.c.l.b16 %v799
      %v1095 = vunpack.c.l.b16 %v800
      %v1096 = vunpack.c.l.b16 %v801
      %v1097 = vunpack.c.l.b16 %v802
      %v1098 = vunpack.c.l.b16 %v803
      %v1099 = vunpack.c.l.b16 %v804
      %v1100 = vunpack.c.l.b16 %v805
      %v1101 = vunpack.c.l.b16 %v806
      %v1102 = vunpack.c.l.b16 %v807
      %v1103 = vunpack.c.l.b16 %v808
      %v1104 = vunpack.c.l.b16 %v809
      %v1105 = vunpack.c.l.b16 %v810
      %v1106 = vunpack.c.l.b16 %v811
      %v1107 = vunpack.c.l.b16 %v812
      %v1108 = vunpack.c.l.b16 %v813
      %v1109 = vunpack.c.l.b16 %v814
      %v1110 = vunpack.c.l.b16 %v815
      %v1111 = vunpack.c.l.b16 %v816
      %v1112 = vunpack.c.l.b16 %v817
      %v1113 = vunpack.c.l.b16 %v818
      %v1114 = vunpack.c.l.b16 %v819
      %v1115 = vunpack.c.l.b16 %v820
      %v1116 = vunpack.c.l.b16 %v821
      %v1117 = vunpack.c.l.b16 %v822
      %v1118 = vunpack.c.l.b16 %v823
      %v1119 = vunpack.c.l.b16 %v824
      %v1120 = vunpack.c.l.b16 %v825
      %v1121 = vunpack.c.l.b16 %v826
      %v1122 = vunpack.c.l.b16 %v827
      %v1123 = vunpack.c.l.b16 %v828
      %v1124 = vunpack.c.l.b16 %v829
      %v1125 = vunpack.c.l.b16 %v830
      %v1126 = vunpack.c.l.b16 %v831
      %v1127 = vunpack.c.l.b16 %v832
      %v1128 = vunpack.c.l.b16 %v833
      %v1129 = vunpack.c.l.b16 %v834
      %v1130 = vunpack.c.l.b16 %v835
      %v1131 = vunpack.c.l.b16 %v836
      %v1132 = vunpack.c.l.b16 %v837
      %v1133 = vunpack.c.l.b16 %v838
      %v1134 = vunpack.c.l.b16 %v839
      %v1135 = vunpack.c.l.b16 %v840
      %v1136 = vunpack.c.l.b16 %v841
      %v1137 = vunpack.c.l.b16 %v842
      %v1138 = vunpack.c.l.b16 %v843
      %v1139 = vunpack.c.l.b16 %v844
      %v1140 = vunpack.c.l.b16 %v845
      %v1141 = vunpack.c.l.b16 %v846
      %v1142 = vunpack.c.l.b16 %v847
      %v1143 = vunpack.c.l.b16 %v848
      %v1144 = vunpack.c.l.b16 %v849
      %v1145 = vunpack.c.l.b16 %v850
      %v1146 = vunpack.c.l.b16 %v851
      %v1147 = vunpack.c.l.b16 %v852
      %v1148 = vunpack.c.l.b16 %v853
      %v1149 = vunpack.c.l.b16 %v854
      %v1150 = vunpack.c.l.b16 %v855
      %v1151 = vunpack.c.l.b16 %v856
      %v1152 = vunpack.c.l.b16 %v857
      %v1153 = vunpack.c.l.b16 %v858
      %v1154 = vunpack.c.l.b16 %v859
      %v1155 = vunpack.c.l.b16 %v860
      %v1156 = vunpack.c.l.b16 %v861
      %v1157 = vunpack.c.l.b16 %v862
      %v1158 = vunpack.c.l.b16 %v863
      %v1159 = vunpack.c.l.b16 %v864
      %v1160 = vunpack.c.l.b16 %v865
      %v1161 = vunpack.c.l.b16 %v866
      %v1162 = vunpack.c.l.b16 %v867
      %v1163 = vunpack.c.l.b16 %v868
      %v1164 = vunpack.c.l.b16 %v869
      %v1165 = vunpack.c.l.b16 %v870
      %v1166 = vunpack.c.l.b16 %v871
      %v1167 = vunpack.c.l.b16 %v872
      %v1168 = vunpack.c.l.b16 %v873
      %v1169 = vunpack.c.l.b16 %v874
      %v1170 = vunpack.c.l.b16 %v875
      %v1171 = vunpack.c.l.b16 %v876
      %v1172 = vunpack.c.l.b16 %v877
      %v1173 = vunpack.c.l.b16 %v878
      %v1174 = vunpack.c.l.b16 %v879
      %v1175 = vunpack.c.l.b16 %v880
      %v1176 = vunpack.c.l.b16 %v881
      %v1177 = vunpack.c.l.b16 %v882
      %v1178 = vunpack.c.l.b16 %v883
      %v1179 = vunpack.c.l.b16 %v884
      %v1180 = vunpack.c.l.b16 %v885
      %v1181 = vunpack.c.l.b16 %v886
      %v1182 = vunpack.c.l.b16 %v887
      %v1183 = vunpack.c.l.b16 %v888
      %v1184 = vunpack.c.l.b16 %v889
      %v1185 = vunpack.c.l.b16 %v890
      %v1186 = vunpack.c.l.b16 %v891
      %v1187 = vunpack.c.l.b16 %v892
      %v1188 = vunpack.c.l.b16 %v893
      %v1189 = vunpack.c.l.b16 %v894
      %v1190 = vunpack.c.l.b16 %v895
      %v1191 = vunpack.c.l.b16 %v896
      %v1192 = vunpack.c.l.b16 %v897
      %v1193 = vunpack.c.l.b16 %v898
      %v1194 = vunpack.c.l.b16 %v899
      %v1195 = vunpack.c.l.b16 %v900
      %v1196 = vunpack.c.l.b16 %v901
      %v1197 = vunpack.c.l.b16 %v902
      %v1198 = vunpack.c.l.b16 %v903
      %v1199 = vunpack.c.l.b16 %v904
      %v1200 = vunpack.c.l.b16 %v905
      %v1201 = vunpack.c.l.b16 %v906
      %v1202 = vunpack.c.l.b16 %v907
      %v1203 = vunpack.c.l.b16 %v908
      %v1204 = vunpack.c.l.b16 %v909
      %v1205 = vunpack.c.l.b16 %v910
      %v1206 = vunpack.c.l.b16 %v911
      %v1207 = vpack.c.b16 %v1064, %v1063
      %v1208 = vpack.c.b16 %v1066, %v1065
      %v1209 = vpack.c.b16 %v1068, %v1067
      %v1210 = vpack.c.b16 %v1070, %v1069
      %v1211 = vpack.c.b16 %v1072, %v1071
      %v1212 = vpack.c.b16 %v1074, %v1073
      %v1213 = vpack.c.b16 %v1076, %v1075
      %v1214 = vpack.c.b16 %v1078, %v1077
      %v1215 = vpack.c.b16 %v1080, %v1079
      %v1216 = vpack.c.b16 %v1082, %v1081
      %v1217 = vpack.c.b16 %v1084, %v1083
      %v1218 = vpack.c.b16 %v1086, %v1085
      %v1219 = vpack.c.b16 %v1088, %v1087
      %v1220 = vpack.c.b16 %v1090, %v1089
      %v1221 = vpack.c.b16 %v1092, %v1091
      %v1222 = vpack.c.b16 %v1094, %v1093
      %v1223 = vpack.c.b16 %v1096, %v1095
      %v1224 = vpack.c.b16 %v1098, %v1097
      %v1225 = vpack.c.b16 %v1100, %v1099
      %v1226 = vpack.c.b16 %v1102, %v1101
      %v1227 = vpack.c.b16 %v1104, %v1103
      %v1228 = vpack.c.b16 %v1106, %v1105
      %v1229 = vpack.c.b16 %v1108, %v1107
      %v1230 = vpack.c.b16 %v1110, %v1109
      %v1231 = vpack.c.b16 %v1112, %v1111
      %v1232 = vpack.c.b16 %v1114, %v1113
      %v1233 = vpack.c.b16 %v1116, %v1115
      %v1234 = vpack.c.b16 %v1118, %v1117
      %v1235 = vpack.c.b16 %v1120, %v1119
      %v1236 = vpack.c.b16 %v1122, %v1121
      %v1237 = vpack.c.b16 %v1124, %v1123
      %v1238 = vpack.c.b16 %v1126, %v1125
      %v1239 = vpack.c.b16 %v1128, %v1127
      %v1240 = vpack.c.b16 %v1130, %v1129
      %v1241 = vpack.c.b16 %v1132, %v1131
      %v1242 = vpack.c.b16 %v1134, %v1133
      %v1243 = vpack.c.b16 %v1136, %v1135
      %v1244 = vpack.c.b16 %v1138, %v1137
      %v1245 = vpack.c.b16 %v1140, %v1139
      %v1246 = vpack.c.b16 %v1142, %v1141
      %v1247 = vpack.c.b16 %v1144, %v1143
      %v1248 = vpack.c.b16 %v1146, %v1145
      %v1249 = vpack.c.b16 %v1148, %v1147
      %v1250 = vpack.c.b16 %v1150, %v1149
      %v1251 = vpack.c.b16 %v1152, %v1151
      %v1252 = vpack.c.b16 %v1154, %v1153
      %v1253 = vpack.c.b16 %v1156, %v1155
      %v1254 = vpack.c.b16 %v1158, %v1157
      %v1255 = vpack.c.b16 %v1160, %v1159
      %v1256 = vpack.c.b16 %v1162, %v1161
      %v1257 = vpack.c.b16 %v1164, %v1163
      %v1258 = vpack.c.b16 %v1166, %v1165
      %v1259 = vpack.c.b16 %v1168, %v1167
      %v1260 = vpack.c.b16 %v1170, %v1169
      %v1261 = vpack.c.b16 %v1172, %v1171
      %v1262 = vpack.c.b16 %v1174, %v1173
      %v1263 = vpack.c.b16 %v1176, %v1175
      %v1264 = vpack.c.b16 %v1178, %v1177
      %v1265 = vpack.c.b16 %v1180, %v1179
      %v1266 = vpack.c.b16 %v1182, %v1181
      %v1267 = vpack.c.b16 %v1184, %v1183
      %v1268 = vpack.c.b16 %v1186, %v1185
      %v1269 = vpack.c.b16 %v1188, %v1187
      %v1270 = vpack.c.b16 %v1190, %v1189
      %v1271 = vpack.c.b16 %v1192, %v1191
      %v1272 = vpack.c.b16 %v1194, %v1193
      %v1273 = vpack.c.b16 %v1196, %v1195
      %v1274 = vpack.c.b16 %v1198, %v1197
      %v1275 = vpack.c.b16 %v1200, %v1199
      %v1276 = vpack.c.b16 %v1202, %v1201
      %v1277 = vpack.c.b16 %v1204, %v1203
      %v1278 = vpack.c.b16 %v1206, %v1205
      %1351 = vmatprep.subr.bf16.mxu0 0
      %1352 = vmatpush1.bf16.msra.mxu0 %v1207
      %1353 = vmatprep.subr.bf16.mxu0 0
      %1354 = vmatpush1.bf16.msra.mxu0 %v1208
      %1355 = vmatprep.subr.bf16.mxu0 0
      %1356 = vmatpush1.bf16.msra.mxu0 %v1209
      %1357 = vmatprep.subr.bf16.mxu0 0
      %1358 = vmatpush1.bf16.msra.mxu0 %v1210
      %1359 = vmatprep.subr.bf16.mxu0 0
      %1360 = vmatpush1.bf16.msra.mxu0 %v1211
      %1361 = vmatprep.subr.bf16.mxu0 0
      %1362 = vmatpush1.bf16.msra.mxu0 %v1212
      %1363 = vmatprep.subr.bf16.mxu0 0
      %1364 = vmatpush1.bf16.msra.mxu0 %v1213
      %1365 = vmatprep.subr.bf16.mxu0 0
      %1366 = vmatpush1.bf16.msra.mxu0 %v1214
      %1367 = vmatprep.subr.bf16.mxu0 0
      %1368 = vmatpush1.bf16.msra.mxu0 %v1215
      %1369 = vmatprep.subr.bf16.mxu0 0
      %1370 = vmatpush1.bf16.msra.mxu0 %v1216
      %1371 = vmatprep.subr.bf16.mxu0 0
      %1372 = vmatpush1.bf16.msra.mxu0 %v1217
      %1373 = vmatprep.subr.bf16.mxu0 0
      %1374 = vmatpush1.bf16.msra.mxu0 %v1218
      %1375 = vmatprep.subr.bf16.mxu0 0
      %1376 = vmatpush1.bf16.msra.mxu0 %v1219
      %1377 = vmatprep.subr.bf16.mxu0 0
      %1378 = vmatpush1.bf16.msra.mxu0 %v1220
      %1379 = vmatprep.subr.bf16.mxu0 0
      %1380 = vmatpush1.bf16.msra.mxu0 %v1221
      %1381 = vmatprep.subr.bf16.mxu0 0
      %1382 = vmatpush1.bf16.msra.mxu0 %v1222
      %1383 = vmatprep.mubr.bf16.mxu0 %v592
      %1384 = vmatmul.mubr.bf16.gmra.mrb[0].mxu0 %v568
      %v1385 = vpop.f32.mrb[0].mxu0
      %v1386 = vadd.f32 %v917, %v1385
      %v1387 = vpop.f32.mrb[0].mxu0
      %v1388 = vpop.f32.mrb[0].mxu0
      %v1389 = vadd.f32 %v917, %v1388
      %v1390 = vpop.f32.mrb[0].mxu0
      %1391 = vmatprep.mubr.bf16.mxu0 %v593
      %1392 = vmatmul.mubr.bf16.gmra.mrb[0].mxu0 %v569
      %v1393 = vpop.f32.mrb[0].mxu0
      %v1394 = vadd.f32 %v917, %v1393
      %v1395 = vpop.f32.mrb[0].mxu0
      %v1396 = vpop.f32.mrb[0].mxu0
      %v1397 = vadd.f32 %v917, %v1396
      %v1398 = vpop.f32.mrb[0].mxu0
      %1399 = vmatprep.mubr.bf16.mxu0 %v594
      %1400 = vmatmul.mubr.bf16.gmra.mrb[0].mxu0 %v570
      %v1401 = vpop.f32.mrb[0].mxu0
      %v1402 = vadd.f32 %v917, %v1401
      %v1403 = vpop.f32.mrb[0].mxu0
      %v1404 = vpop.f32.mrb[0].mxu0
      %v1405 = vadd.f32 %v917, %v1404
      %v1406 = vpop.f32.mrb[0].mxu0
      %1407 = vmatprep.mubr.bf16.mxu0 %v595
      %1408 = vmatmul.mubr.bf16.gmra.mrb[0].mxu0 %v571
      %v1409 = vpop.f32.mrb[0].mxu0
      %v1410 = vadd.f32 %v917, %v1409
      %v1411 = vpop.f32.mrb[0].mxu0
      %v1412 = vpop.f32.mrb[0].mxu0
      %v1413 = vadd.f32 %v917, %v1412
      %v1414 = vpop.f32.mrb[0].mxu0
      %1415 = vmatprep.mubr.bf16.mxu0 %v596
      %1416 = vmatmul.mubr.bf16.gmra.mrb[0].mxu0 %v572
      %v1417 = vpop.f32.mrb[0].mxu0
      %v1418 = vadd.f32 %v917, %v1417
      %v1419 = vpop.f32.mrb[0].mxu0
      %v1420 = vpop.f32.mrb[0].mxu0
      %v1421 = vadd.f32 %v917, %v1420
      %v1422 = vpop.f32.mrb[0].mxu0
      %1423 = vmatprep.mubr.bf16.mxu0 %v597
      %1424 = vmatmul.mubr.bf16.gmra.mrb[0].mxu0 %v573
      %v1425 = vpop.f32.mrb[0].mxu0
      %v1426 = vadd.f32 %v917, %v1425
      %v1427 = vpop.f32.mrb[0].mxu0
      %v1428 = vpop.f32.mrb[0].mxu0
      %v1429 = vadd.f32 %v917, %v1428
      %v1430 = vpop.f32.mrb[0].mxu0
      %1431 = vmatprep.mubr.bf16.mxu0 %v598
      %1432 = vmatmul.mubr.bf16.gmra.mrb[0].mxu0 %v574
      %v1433 = vpop.f32.mrb[0].mxu0
      %v1434 = vadd.f32 %v917, %v1433
      %v1435 = vpop.f32.mrb[0].mxu0
      %v1436 = vpop.f32.mrb[0].mxu0
      %v1437 = vadd.f32 %v917, %v1436
      %v1438 = vpop.f32.mrb[0].mxu0
      %1439 = vmatprep.mubr.bf16.mxu0 %v599
      %1440 = vmatmul.mubr.bf16.gmra.mrb[0].mxu0 %v575
      %v1441 = vpop.f32.mrb[0].mxu0
      %v1442 = vadd.f32 %v917, %v1441
      %v1443 = vpop.f32.mrb[0].mxu0
      %v1444 = vpop.f32.mrb[0].mxu0
      %v1445 = vadd.f32 %v917, %v1444
      %v1446 = vpop.f32.mrb[0].mxu0
      %1447 = vdwg.mxu0
      %1448 = vmatprep.subr.bf16.mxu0 0
      %1449 = vmatpush1.bf16.msra.mxu0 %v1223
      %1450 = vmatprep.subr.bf16.mxu0 0
      %1451 = vmatpush1.bf16.msra.mxu0 %v1224
      %1452 = vmatprep.subr.bf16.mxu0 0
      %1453 = vmatpush1.bf16.msra.mxu0 %v1225
      %1454 = vmatprep.subr.bf16.mxu0 0
      %1455 = vmatpush1.bf16.msra.mxu0 %v1226
      %1456 = vmatprep.subr.bf16.mxu0 0
      %1457 = vmatpush1.bf16.msra.mxu0 %v1227
      %1458 = vmatprep.subr.bf16.mxu0 0
      %1459 = vmatpush1.bf16.msra.mxu0 %v1228
      %1460 = vmatprep.subr.bf16.mxu0 0
      %1461 = vmatpush1.bf16.msra.mxu0 %v1229
      %1462 = vmatprep.subr.bf16.mxu0 0
      %1463 = vmatpush1.bf16.msra.mxu0 %v1230
      %1464 = vmatprep.subr.bf16.mxu0 0
      %1465 = vmatpush1.bf16.msra.mxu0 %v1231
      %1466 = vmatprep.subr.bf16.mxu0 0
      %1467 = vmatpush1.bf16.msra.mxu0 %v1232
      %1468 = vmatprep.subr.bf16.mxu0 0
      %1469 = vmatpush1.bf16.msra.mxu0 %v1233
      %1470 = vmatprep.subr.bf16.mxu0 0
      %1471 = vmatpush1.bf16.msra.mxu0 %v1234
      %1472 = vmatprep.subr.bf16.mxu0 0
      %1473 = vmatpush1.bf16.msra.mxu0 %v1235
      %1474 = vmatprep.subr.bf16.mxu0 0
      %1475 = vmatpush1.bf16.msra.mxu0 %v1236
      %1476 = vmatprep.subr.bf16.mxu0 0
      %1477 = vmatpush1.bf16.msra.mxu0 %v1237
      %1478 = vmatprep.subr.bf16.mxu0 0
      %1479 = vmatpush1.bf16.msra.mxu0 %v1238
      %1480 = vmatprep.mubr.bf16.mxu0 %v640
      %1481 = vmatmul.mubr.bf16.gmra.mrb[0].mxu0 %v616
      %v1482 = vpop.f32.mrb[0].mxu0
      %v1483 = vadd.f32 %v1386, %v1482
      %v1484 = vpop.f32.mrb[0].mxu0
      %v1485 = vpop.f32.mrb[0].mxu0
      %v1486 = vadd.f32 %v1389, %v1485
      %v1487 = vpop.f32.mrb[0].mxu0
      %1488 = vmatprep.mubr.bf16.mxu0 %v641
      %1489 = vmatmul.mubr.bf16.gmra.mrb[0].mxu0 %v617
      %v1490 = vpop.f32.mrb[0].mxu0
      %v1491 = vadd.f32 %v1394, %v1490
      %v1492 = vpop.f32.mrb[0].mxu0
      %v1493 = vpop.f32.mrb[0].mxu0
      %v1494 = vadd.f32 %v1397, %v1493
      %v1495 = vpop.f32.mrb[0].mxu0
      %1496 = vmatprep.mubr.bf16.mxu0 %v642
      %1497 = vmatmul.mubr.bf16.gmra.mrb[0].mxu0 %v618
      %v1498 = vpop.f32.mrb[0].mxu0
      %v1499 = vadd.f32 %v1402, %v1498
      %v1500 = vpop.f32.mrb[0].mxu0
      %v1501 = vpop.f32.mrb[0].mxu0
      %v1502 = vadd.f32 %v1405, %v1501
      %v1503 = vpop.f32.mrb[0].mxu0
      %1504 = vmatprep.mubr.bf16.mxu0 %v643
      %1505 = vmatmul.mubr.bf16.gmra.mrb[0].mxu0 %v619
      %v1506 = vpop.f32.mrb[0].mxu0
      %v1507 = vadd.f32 %v1410, %v1506
      %v1508 = vpop.f32.mrb[0].mxu0
      %v1509 = vpop.f32.mrb[0].mxu0
      %v1510 = vadd.f32 %v1413, %v1509
      %v1511 = vpop.f32.mrb[0].mxu0
      %1512 = vmatprep.mubr.bf16.mxu0 %v644
      %1513 = vmatmul.mubr.bf16.gmra.mrb[0].mxu0 %v620
      %v1514 = vpop.f32.mrb[0].mxu0
      %v1515 = vadd.f32 %v1418, %v1514
      %v1516 = vpop.f32.mrb[0].mxu0
      %v1517 = vpop.f32.mrb[0].mxu0
      %v1518 = vadd.f32 %v1421, %v1517
      %v1519 = vpop.f32.mrb[0].mxu0
      %1520 = vmatprep.mubr.bf16.mxu0 %v645
      %1521 = vmatmul.mubr.bf16.gmra.mrb[0].mxu0 %v621
      %v1522 = vpop.f32.mrb[0].mxu0
      %v1523 = vadd.f32 %v1426, %v1522
      %v1524 = vpop.f32.mrb[0].mxu0
      %v1525 = vpop.f32.mrb[0].mxu0
      %v1526 = vadd.f32 %v1429, %v1525
      %v1527 = vpop.f32.mrb[0].mxu0
      %1528 = vmatprep.mubr.bf16.mxu0 %v646
      %1529 = vmatmul.mubr.bf16.gmra.mrb[0].mxu0 %v622
      %v1530 = vpop.f32.mrb[0].mxu0
      %v1531 = vadd.f32 %v1434, %v1530
      %v1532 = vpop.f32.mrb[0].mxu0
      %v1533 = vpop.f32.mrb[0].mxu0
      %v1534 = vadd.f32 %v1437, %v1533
      %v1535 = vpop.f32.mrb[0].mxu0
      %1536 = vmatprep.mubr.bf16.mxu0 %v647
      %1537 = vmatmul.mubr.bf16.gmra.mrb[0].mxu0 %v623
      %v1538 = vpop.f32.mrb[0].mxu0
      %v1539 = vadd.f32 %v1442, %v1538
      %v1540 = vpop.f32.mrb[0].mxu0
      %v1541 = vpop.f32.mrb[0].mxu0
      %v1542 = vadd.f32 %v1445, %v1541
      %v1543 = vpop.f32.mrb[0].mxu0
      %1544 = vdwg.mxu0
      %1545 = vmatprep.subr.bf16.mxu0 0
      %1546 = vmatpush1.bf16.msra.mxu0 %v1239
      %1547 = vmatprep.subr.bf16.mxu0 0
      %1548 = vmatpush1.bf16.msra.mxu0 %v1240
      %1549 = vmatprep.subr.bf16.mxu0 0
      %1550 = vmatpush1.bf16.msra.mxu0 %v1241
      %1551 = vmatprep.subr.bf16.mxu0 0
      %1552 = vmatpush1.bf16.msra.mxu0 %v1242
      %1553 = vmatprep.subr.bf16.mxu0 0
      %1554 = vmatpush1.bf16.msra.mxu0 %v1243
      %1555 = vmatprep.subr.bf16.mxu0 0
      %1556 = vmatpush1.bf16.msra.mxu0 %v1244
      %1557 = vmatprep.subr.bf16.mxu0 0
      %1558 = vmatpush1.bf16.msra.mxu0 %v1245
      %1559 = vmatprep.subr.bf16.mxu0 0
      %1560 = vmatpush1.bf16.msra.mxu0 %v1246
      %1561 = vmatprep.subr.bf16.mxu0 0
      %1562 = vmatpush1.bf16.msra.mxu0 %v1247
      %1563 = vmatprep.subr.bf16.mxu0 0
      %1564 = vmatpush1.bf16.msra.mxu0 %v1248
      %1565 = vmatprep.subr.bf16.mxu0 0
      %1566 = vmatpush1.bf16.msra.mxu0 %v1249
      %1567 = vmatprep.subr.bf16.mxu0 0
      %1568 = vmatpush1.bf16.msra.mxu0 %v1250
      %1569 = vmatprep.subr.bf16.mxu0 0
      %1570 = vmatpush1.bf16.msra.mxu0 %v1251
      %1571 = vmatprep.subr.bf16.mxu0 0
      %1572 = vmatpush1.bf16.msra.mxu0 %v1252
      %1573 = vmatprep.subr.bf16.mxu0 0
      %1574 = vmatpush1.bf16.msra.mxu0 %v1253
      %1575 = vmatprep.subr.bf16.mxu0 0
      %1576 = vmatpush1.bf16.msra.mxu0 %v1254
      %1577 = vmatprep.mubr.bf16.mxu0 %v688
      %1578 = vmatmul.mubr.bf16.gmra.mrb[0].mxu0 %v664
      %v1579 = vpop.f32.mrb[0].mxu0
      %v1580 = vadd.f32 %v1483, %v1579
      %v1581 = vpop.f32.mrb[0].mxu0
      %v1582 = vpop.f32.mrb[0].mxu0
      %v1583 = vadd.f32 %v1486, %v1582
      %v1584 = vpop.f32.mrb[0].mxu0
      %1585 = vmatprep.mubr.bf16.mxu0 %v689
      %1586 = vmatmul.mubr.bf16.gmra.mrb[0].mxu0 %v665
      %v1587 = vpop.f32.mrb[0].mxu0
      %v1588 = vadd.f32 %v1491, %v1587
      %v1589 = vpop.f32.mrb[0].mxu0
      %v1590 = vpop.f32.mrb[0].mxu0
      %v1591 = vadd.f32 %v1494, %v1590
      %v1592 = vpop.f32.mrb[0].mxu0
      %1593 = vmatprep.mubr.bf16.mxu0 %v690
      %1594 = vmatmul.mubr.bf16.gmra.mrb[0].mxu0 %v666
      %v1595 = vpop.f32.mrb[0].mxu0
      %v1596 = vadd.f32 %v1499, %v1595
      %v1597 = vpop.f32.mrb[0].mxu0
      %v1598 = vpop.f32.mrb[0].mxu0
      %v1599 = vadd.f32 %v1502, %v1598
      %v1600 = vpop.f32.mrb[0].mxu0
      %1601 = vmatprep.mubr.bf16.mxu0 %v691
      %1602 = vmatmul.mubr.bf16.gmra.mrb[0].mxu0 %v667
      %v1603 = vpop.f32.mrb[0].mxu0
      %v1604 = vadd.f32 %v1507, %v1603
      %v1605 = vpop.f32.mrb[0].mxu0
      %v1606 = vpop.f32.mrb[0].mxu0
      %v1607 = vadd.f32 %v1510, %v1606
      %v1608 = vpop.f32.mrb[0].mxu0
      %1609 = vmatprep.mubr.bf16.mxu0 %v692
      %1610 = vmatmul.mubr.bf16.gmra.mrb[0].mxu0 %v668
      %v1611 = vpop.f32.mrb[0].mxu0
      %v1612 = vadd.f32 %v1515, %v1611
      %v1613 = vpop.f32.mrb[0].mxu0
      %v1614 = vpop.f32.mrb[0].mxu0
      %v1615 = vadd.f32 %v1518, %v1614
      %v1616 = vpop.f32.mrb[0].mxu0
      %1617 = vmatprep.mubr.bf16.mxu0 %v693
      %1618 = vmatmul.mubr.bf16.gmra.mrb[0].mxu0 %v669
      %v1619 = vpop.f32.mrb[0].mxu0
      %v1620 = vadd.f32 %v1523, %v1619
      %v1621 = vpop.f32.mrb[0].mxu0
      %v1622 = vpop.f32.mrb[0].mxu0
      %v1623 = vadd.f32 %v1526, %v1622
      %v1624 = vpop.f32.mrb[0].mxu0
      %1625 = vmatprep.mubr.bf16.mxu0 %v694
      %1626 = vmatmul.mubr.bf16.gmra.mrb[0].mxu0 %v670
      %v1627 = vpop.f32.mrb[0].mxu0
      %v1628 = vadd.f32 %v1531, %v1627
      %v1629 = vpop.f32.mrb[0].mxu0
      %v1630 = vpop.f32.mrb[0].mxu0
      %v1631 = vadd.f32 %v1534, %v1630
      %v1632 = vpop.f32.mrb[0].mxu0
      %1633 = vmatprep.mubr.bf16.mxu0 %v695
      %1634 = vmatmul.mubr.bf16.gmra.mrb[0].mxu0 %v671
      %v1635 = vpop.f32.mrb[0].mxu0
      %v1636 = vadd.f32 %v1539, %v1635
      %v1637 = vpop.f32.mrb[0].mxu0
      %v1638 = vpop.f32.mrb[0].mxu0
      %v1639 = vadd.f32 %v1542, %v1638
      %v1640 = vpop.f32.mrb[0].mxu0
      %1641 = vdwg.mxu0
      %1642 = vmatprep.subr.bf16.mxu0 0
      %1643 = vmatpush1.bf16.msra.mxu0 %v1255
      %1644 = vmatprep.subr.bf16.mxu0 0
      %1645 = vmatpush1.bf16.msra.mxu0 %v1256
      %1646 = vmatprep.subr.bf16.mxu0 0
      %1647 = vmatpush1.bf16.msra.mxu0 %v1257
      %1648 = vmatprep.subr.bf16.mxu0 0
      %1649 = vmatpush1.bf16.msra.mxu0 %v1258
      %1650 = vmatprep.subr.bf16.mxu0 0
      %1651 = vmatpush1.bf16.msra.mxu0 %v1259
      %1652 = vmatprep.subr.bf16.mxu0 0
      %1653 = vmatpush1.bf16.msra.mxu0 %v1260
      %1654 = vmatprep.subr.bf16.mxu0 0
      %1655 = vmatpush1.bf16.msra.mxu0 %v1261
      %1656 = vmatprep.subr.bf16.mxu0 0
      %1657 = vmatpush1.bf16.msra.mxu0 %v1262
      %1658 = vmatprep.subr.bf16.mxu0 0
      %1659 = vmatpush1.bf16.msra.mxu0 %v1263
      %1660 = vmatprep.subr.bf16.mxu0 0
      %1661 = vmatpush1.bf16.msra.mxu0 %v1264
      %1662 = vmatprep.subr.bf16.mxu0 0
      %1663 = vmatpush1.bf16.msra.mxu0 %v1265
      %1664 = vmatprep.subr.bf16.mxu0 0
      %1665 = vmatpush1.bf16.msra.mxu0 %v1266
      %1666 = vmatprep.subr.bf16.mxu0 0
      %1667 = vmatpush1.bf16.msra.mxu0 %v1267
      %1668 = vmatprep.subr.bf16.mxu0 0
      %1669 = vmatpush1.bf16.msra.mxu0 %v1268
      %1670 = vmatprep.subr.bf16.mxu0 0
      %1671 = vmatpush1.bf16.msra.mxu0 %v1269
      %1672 = vmatprep.subr.bf16.mxu0 0
      %1673 = vmatpush1.bf16.msra.mxu0 %v1270
      %1674 = vmatprep.mubr.bf16.mxu0 %v736
      %1675 = vmatmul.mubr.bf16.gmra.mrb[0].mxu0 %v712
      %v1676 = vpop.f32.mrb[0].mxu0
      %v1677 = vadd.f32 %v1580, %v1676
      %v1678 = vpop.f32.mrb[0].mxu0
      %v1679 = vpop.f32.mrb[0].mxu0
      %v1680 = vadd.f32 %v1583, %v1679
      %v1681 = vpop.f32.mrb[0].mxu0
      %1682 = vmatprep.mubr.bf16.mxu0 %v737
      %1683 = vmatmul.mubr.bf16.gmra.mrb[0].mxu0 %v713
      %v1684 = vpop.f32.mrb[0].mxu0
      %v1685 = vadd.f32 %v1588, %v1684
      %v1686 = vpop.f32.mrb[0].mxu0
      %v1687 = vpop.f32.mrb[0].mxu0
      %v1688 = vadd.f32 %v1591, %v1687
      %v1689 = vpop.f32.mrb[0].mxu0
      %1690 = vmatprep.mubr.bf16.mxu0 %v738
      %1691 = vmatmul.mubr.bf16.gmra.mrb[0].mxu0 %v714
      %v1692 = vpop.f32.mrb[0].mxu0
      %v1693 = vadd.f32 %v1596, %v1692
      %v1694 = vpop.f32.mrb[0].mxu0
      %v1695 = vpop.f32.mrb[0].mxu0
      %v1696 = vadd.f32 %v1599, %v1695
      %v1697 = vpop.f32.mrb[0].mxu0
      %1698 = vmatprep.mubr.bf16.mxu0 %v739
      %1699 = vmatmul.mubr.bf16.gmra.mrb[0].mxu0 %v715
      %v1700 = vpop.f32.mrb[0].mxu0
      %v1701 = vadd.f32 %v1604, %v1700
      %v1702 = vpop.f32.mrb[0].mxu0
      %v1703 = vpop.f32.mrb[0].mxu0
      %v1704 = vadd.f32 %v1607, %v1703
      %v1705 = vpop.f32.mrb[0].mxu0
      %1706 = vmatprep.mubr.bf16.mxu0 %v740
      %1707 = vmatmul.mubr.bf16.gmra.mrb[0].mxu0 %v716
      %v1708 = vpop.f32.mrb[0].mxu0
      %v1709 = vadd.f32 %v1612, %v1708
      %v1710 = vpop.f32.mrb[0].mxu0
      %v1711 = vpop.f32.mrb[0].mxu0
      %v1712 = vadd.f32 %v1615, %v1711
      %v1713 = vpop.f32.mrb[0].mxu0
      %1714 = vmatprep.mubr.bf16.mxu0 %v741
      %1715 = vmatmul.mubr.bf16.gmra.mrb[0].mxu0 %v717
      %v1716 = vpop.f32.mrb[0].mxu0
      %v1717 = vadd.f32 %v1620, %v1716
      %v1718 = vpop.f32.mrb[0].mxu0
      %v1719 = vpop.f32.mrb[0].mxu0
      %v1720 = vadd.f32 %v1623, %v1719
      %v1721 = vpop.f32.mrb[0].mxu0
      %1722 = vmatprep.mubr.bf16.mxu0 %v742
      %1723 = vmatmul.mubr.bf16.gmra.mrb[0].mxu0 %v718
      %v1724 = vpop.f32.mrb[0].mxu0
      %v1725 = vadd.f32 %v1628, %v1724
      %v1726 = vpop.f32.mrb[0].mxu0
      %v1727 = vpop.f32.mrb[0].mxu0
      %v1728 = vadd.f32 %v1631, %v1727
      %v1729 = vpop.f32.mrb[0].mxu0
      %1730 = vmatprep.mubr.bf16.mxu0 %v743
      %1731 = vmatmul.mubr.bf16.gmra.mrb[0].mxu0 %v719
      %v1732 = vpop.f32.mrb[0].mxu0
      %v1733 = vadd.f32 %v1636, %v1732
      %v1734 = vpop.f32.mrb[0].mxu0
      %v1735 = vpop.f32.mrb[0].mxu0
      %v1736 = vadd.f32 %v1639, %v1735
      %v1737 = vpop.f32.mrb[0].mxu0
      %1738 = vdwg.mxu0
      %1739 = vmatprep.subr.bf16.mxu0 0
      %1740 = vmatpush1.bf16.msra.mxu0 %v1271
      %1741 = vmatprep.subr.bf16.mxu0 0
      %1742 = vmatpush1.bf16.msra.mxu0 %v1272
      %1743 = vmatprep.subr.bf16.mxu0 0
      %1744 = vmatpush1.bf16.msra.mxu0 %v1273
      %1745 = vmatprep.subr.bf16.mxu0 0
      %1746 = vmatpush1.bf16.msra.mxu0 %v1274
      %1747 = vmatprep.subr.bf16.mxu0 0
      %1748 = vmatpush1.bf16.msra.mxu0 %v1275
      %1749 = vmatprep.subr.bf16.mxu0 0
      %1750 = vmatpush1.bf16.msra.mxu0 %v1276
      %1751 = vmatprep.subr.bf16.mxu0 0
      %1752 = vmatpush1.bf16.msra.mxu0 %v1277
      %1753 = vmatprep.subr.bf16.mxu0 0
      %1754 = vmatpush1.bf16.msra.mxu0 %v1278
      %1755 = vmatprep.subr.bf16.mxu0 0
      %1756 = vmatpush1.bf16.msra.mxu0 0
      %1757 = vmatprep.subr.bf16.mxu0 0
      %1758 = vmatpush1.bf16.msra.mxu0 0
      %1759 = vmatprep.subr.bf16.mxu0 0
      %1760 = vmatpush1.bf16.msra.mxu0 0
      %1761 = vmatprep.subr.bf16.mxu0 0
      %1762 = vmatpush1.bf16.msra.mxu0 0
      %1763 = vmatprep.subr.bf16.mxu0 0
      %1764 = vmatpush1.bf16.msra.mxu0 0
      %1765 = vmatprep.subr.bf16.mxu0 0
      %1766 = vmatpush1.bf16.msra.mxu0 0
      %1767 = vmatprep.subr.bf16.mxu0 0
      %1768 = vmatpush1.bf16.msra.mxu0 0
      %1769 = vmatprep.subr.bf16.mxu0 0
      %1770 = vmatpush1.bf16.msra.mxu0 0
      %1771 = vmatprep.mubr.bf16.mxu0 0
      %1772 = vmatmul.mubr.bf16.gmra.mrb[0].mxu0 %v760
      %v1773 = vpop.f32.mrb[0].mxu0
      %v1774 = vadd.f32 %v1677, %v1773
      %v1775 = vpop.f32.mrb[0].mxu0
      %v1776 = vpop.f32.mrb[0].mxu0
      %v1777 = vadd.f32 %v1680, %v1776
      %v1778 = vpop.f32.mrb[0].mxu0
      %1779 = vmatprep.mubr.bf16.mxu0 0
      %1780 = vmatmul.mubr.bf16.gmra.mrb[0].mxu0 %v761
      %v1781 = vpop.f32.mrb[0].mxu0
      %v1782 = vadd.f32 %v1685, %v1781
      %v1783 = vpop.f32.mrb[0].mxu0
      %v1784 = vpop.f32.mrb[0].mxu0
      %v1785 = vadd.f32 %v1688, %v1784
      %v1786 = vpop.f32.mrb[0].mxu0
      %1787 = vmatprep.mubr.bf16.mxu0 0
      %1788 = vmatmul.mubr.bf16.gmra.mrb[0].mxu0 %v762
      %v1789 = vpop.f32.mrb[0].mxu0
      %v1790 = vadd.f32 %v1693, %v1789
      %v1791 = vpop.f32.mrb[0].mxu0
      %v1792 = vpop.f32.mrb[0].mxu0
      %v1793 = vadd.f32 %v1696, %v1792
      %v1794 = vpop.f32.mrb[0].mxu0
      %1795 = vmatprep.mubr.bf16.mxu0 0
      %1796 = vmatmul.mubr.bf16.gmra.mrb[0].mxu0 %v763
      %v1797 = vpop.f32.mrb[0].mxu0
      %v1798 = vadd.f32 %v1701, %v1797
      %v1799 = vpop.f32.mrb[0].mxu0
      %v1800 = vpop.f32.mrb[0].mxu0
      %v1801 = vadd.f32 %v1704, %v1800
      %v1802 = vpop.f32.mrb[0].mxu0
      %1803 = vmatprep.mubr.bf16.mxu0 0
      %1804 = vmatmul.mubr.bf16.gmra.mrb[0].mxu0 %v764
      %v1805 = vpop.f32.mrb[0].mxu0
      %v1806 = vadd.f32 %v1709, %v1805
      %v1807 = vpop.f32.mrb[0].mxu0
      %v1808 = vpop.f32.mrb[0].mxu0
      %v1809 = vadd.f32 %v1712, %v1808
      %v1810 = vpop.f32.mrb[0].mxu0
      %1811 = vmatprep.mubr.bf16.mxu0 0
      %1812 = vmatmul.mubr.bf16.gmra.mrb[0].mxu0 %v765
      %v1813 = vpop.f32.mrb[0].mxu0
      %v1814 = vadd.f32 %v1717, %v1813
      %v1815 = vpop.f32.mrb[0].mxu0
      %v1816 = vpop.f32.mrb[0].mxu0
      %v1817 = vadd.f32 %v1720, %v1816
      %v1818 = vpop.f32.mrb[0].mxu0
      %1819 = vmatprep.mubr.bf16.mxu0 0
      %1820 = vmatmul.mubr.bf16.gmra.mrb[0].mxu0 %v766
      %v1821 = vpop.f32.mrb[0].mxu0
      %v1822 = vadd.f32 %v1725, %v1821
      %v1823 = vpop.f32.mrb[0].mxu0
      %v1824 = vpop.f32.mrb[0].mxu0
      %v1825 = vadd.f32 %v1728, %v1824
      %v1826 = vpop.f32.mrb[0].mxu0
      %1827 = vmatprep.mubr.bf16.mxu0 0
      %1828 = vmatmul.mubr.bf16.gmra.mrb[0].mxu0 %v767
      %v1829 = vpop.f32.mrb[0].mxu0
      %v1830 = vadd.f32 %v1733, %v1829
      %v1831 = vpop.f32.mrb[0].mxu0
      %v1832 = vpop.f32.mrb[0].mxu0
      %v1833 = vadd.f32 %v1736, %v1832
      %v1834 = vpop.f32.mrb[0].mxu0
      %1835 = vdwg.mxu0
      %v1836 = vmax.f32 %v1774, 0.0
      %v1837 = vmax.f32 %v1777, 0.0
      %v1838 = vmax.f32 %v1782, 0.0
      %v1839 = vmax.f32 %v1785, 0.0
      %v1840 = vmax.f32 %v1790, 0.0
      %v1841 = vmax.f32 %v1793, 0.0
      %v1842 = vmax.f32 %v1798, 0.0
      %v1843 = vmax.f32 %v1801, 0.0
      %v1844 = vmax.f32 %v1806, 0.0
      %v1845 = vmax.f32 %v1809, 0.0
      %v1846 = vmax.f32 %v1814, 0.0
      %v1847 = vmax.f32 %v1817, 0.0
      %v1848 = vmax.f32 %v1822, 0.0
      %v1849 = vmax.f32 %v1825, 0.0
      %v1850 = vmax.f32 %v1830, 0.0
      %v1851 = vmax.f32 %v1833, 0.0
      %v1852 = vadd.f32 %v1836, %v505
      %v1853 = vadd.f32 %v1837, %v507
      %v1854 = vadd.f32 %v1838, %v509
      %v1855 = vadd.f32 %v1839, %v511
      %v1856 = vadd.f32 %v1840, %v513
      %v1857 = vadd.f32 %v1841, %v515
      %v1858 = vadd.f32 %v1842, %v517
      %v1859 = vadd.f32 %v1843, %v519
      %v1860 = vadd.f32 %v1844, %v521
      %v1861 = vadd.f32 %v1845, %v523
      %v1862 = vadd.f32 %v1846, %v525
      %v1863 = vadd.f32 %v1847, %v527
      %v1864 = vadd.f32 %v1848, %v529
      %v1865 = vadd.f32 %v1849, %v531
      %v1866 = vadd.f32 %v1850, %v533
      %v1867 = vadd.f32 %v1851, %v535
      %1868 = vst [vmem:[%s231] sm:$0xff] %v1852
      %1869 = vst [vmem:[%s231 + $0x8] sm:$0xff] %v1853
      %1870 = vst [vmem:[%s231 + $0x10] sm:$0xff] %v1854
      %1871 = vst [vmem:[%s231 + $0x18] sm:$0xff] %v1855
      %1872 = vst [vmem:[%s231 + $0x20] sm:$0xff] %v1856
      %1873 = vst [vmem:[%s231 + $0x28] sm:$0xff] %v1857
      %1874 = vst [vmem:[%s231 + $0x30] sm:$0xff] %v1858
      %1875 = vst [vmem:[%s231 + $0x38] sm:$0xff] %v1859
      %1876 = vst [vmem:[%s231 + $0x40] sm:$0xff] %v1860
      %1877 = vst [vmem:[%s231 + $0x48] sm:$0xff] %v1861
      %1878 = vst [vmem:[%s231 + $0x50] sm:$0xff] %v1862
      %1879 = vst [vmem:[%s231 + $0x58] sm:$0xff] %v1863
      %1880 = vst [vmem:[%s231 + $0x60] sm:$0xff] %v1864
      %1881 = vst [vmem:[%s231 + $0x68] sm:$0xff] %v1865
      %1882 = vst [vmem:[%s231 + $0x70] sm:$0xff] %v1866
      %1883 = vst [vmem:[%s231 + $0x78] sm:$0xff] %v1867
      %s1884 = smul.u32 8, %s16
      %p1885 = scmp.lt.s32.totalorder %s1884, 15
      %s1886 = scalar_select %p1885, %s1884, 15
      %s1887 = smul.addr %s1886, 2
      %s1888 = smul.addr %s1887, 8
      %s1889 = scalar_lea.vmem %s5, %s1888
      // Predicated region
      $region41: #{tcn_gcn_unit_forward.1} parent=39 // pred_check
        %p1890 = pneg %p144
      $region42: #{tcn_gcn_unit_forward.1} parent=39 // pred_check_branch
        %1892 = sbr.rel (%p1890) target = $region44
      $region43: #{tcn_gcn_unit_forward.1} parent=39 // pred_region
        %s1893 = smul.u32 8, %s16
      $region44: #{tcn_gcn_unit_forward.1} parent=39 // pred_fallthru
        _
    $region40: #{tcn_gcn_unit_forward.1} parent=5 // pred_fallthru
      _
    %p1894 = scmp.le.s32.totalorder 2, %s11
    // Predicated region
    $region45: #{tcn_gcn_unit_forward.1} parent=5 // pred_check
      %p1895 = pneg %p1894
    $region46: #{tcn_gcn_unit_forward.1} parent=5 // pred_check_branch
      %1897 = sbr.rel (%p1895) target = $region48
    $region47: #{tcn_gcn_unit_forward.1} parent=5 // pred_region
      %s1898 = ssub.s32 %s11, 2
      // Predicated region
      $region49: #{tcn_gcn_unit_forward.1} parent=47 // pred_check
        %p1899 = pneg %p150
      $region50: #{tcn_gcn_unit_forward.1} parent=47 // pred_check_branch
        %1901 = sbr.rel (%p1899) target = $region52
      $region51: #{tcn_gcn_unit_forward.1} parent=47 // pred_region
        %s1902 = smul.u32 8, %s17
        %p1903 = scmp.lt.s32.totalorder %s1902, 15
        %s1904 = scalar_select %p1903, %s1902, 15
        %s1905 = smul.addr %s1904, 2
        %s1906 = smul.addr %s1905, 8
        %s1907 = scalar_lea.vmem %s5, %s1906
      $region52: #{tcn_gcn_unit_forward.1} parent=47 // pred_fallthru
        _
    $region48: #{tcn_gcn_unit_forward.1} parent=5 // pred_fallthru
      _
  $region6: #{tcn_gcn_unit_forward.1} parent=0 // loop_footer
    %s15 = sadd.s32 1, %s11
  $region7: #{tcn_gcn_unit_forward.1} parent=0 // loop_footer_branch
    %10 = sbr.rel target = $region3
  $region8: #{tcn_gcn_unit_forward.1} parent=0 // loop_exit
    _

</llo_original>
